<compile_context>
chip_gen: v7x
topology: tpu7x:2x2x1
jax: 0.10.0
libtpu: 0.0.40
codegen_flags: <defaults>
</compile_context>

<pallas_src>
import functools
import math

import jax
import jax.numpy as jnp
from jax.experimental import pallas as pl
from jax.experimental.pallas import tpu as pltpu

# ---------------- synthetic BERT config (scaled down from bert-base) ----------
VOCAB = 128
TYPE_VOCAB = 2
MAX_POS = 64
HIDDEN = 32          # stands in for 768
NUM_HEADS = 2
HEAD_DIM = HIDDEN // NUM_HEADS
INTERMEDIATE = 64    # stands in for 3072
NUM_LAYERS = 2       # stands in for 12
LN_EPS = 1e-12
NUM_POS_CLASSES = 2
NUM_ANS_CLASSES = 5
HEAD_LANES = 128     # lane-dense padded width for the fused classifier output


# ---------------- BlockSpec helpers --------------------------------------------
def _full_spec(shape):
    """Whole-array block, same block for every grid step."""
    zeros = (0,) * len(shape)
    return pl.BlockSpec(shape, lambda l, _z=zeros: _z)


def _stacked_spec(per_layer_shape):
    """Per-layer slice of an (L, ...) stacked weight; leading dim squeezed."""
    zeros = (0,) * len(per_layer_shape)
    return pl.BlockSpec((None,) + tuple(per_layer_shape),
                        lambda l, _z=zeros: (l,) + _z)


# ---------------- in-kernel helpers --------------------------------------------
def _layernorm(y, gamma, beta):
    """Row-wise LayerNorm over the last axis (f32 math)."""
    mu = jnp.mean(y, axis=-1, keepdims=True)
    yc = y - mu
    var = jnp.mean(yc * yc, axis=-1, keepdims=True)
    return yc * jax.lax.rsqrt(var + LN_EPS) * gamma + beta


def _bf16_matmul_bias(a_f32, w_ref, b_ref):
    """bf16 MXU matmul with f32 accumulation, + f32 bias. w_ref is bf16."""
    return (jnp.dot(a_f32.astype(jnp.bfloat16), w_ref[...],
                    preferred_element_type=jnp.float32) + b_ref[...])


# ---------------- the single fused kernel --------------------------------------
def _fused_bert_kernel(x_emb_ref, mask_ref, embg_ref, embb_ref,
                       qkv_w_ref, qkv_b_ref, ao_w_ref, ao_b_ref,
                       ln1_g_ref, ln1_b_ref, i_w_ref, i_b_ref,
                       o_w_ref, o_b_ref, ln2_g_ref, ln2_b_ref,
                       pool_w_ref, pool_b_ref, posw_ref, answ_ref, headb_ref,
                       head_out_ref, x_state,
                       *, batch, seq, nh, dh, scale):
    l = pl.program_id(0)
    hid = nh * dh

    # --- grid step 0: embedding LayerNorm (folded in, saves a pallas_call) ---
    # TODO(synk): embedding/attention/hidden Dropout layers are identity (eval mode).
    @pl.when(l == 0)
    def _():
        x_state[...] = _layernorm(x_emb_ref[...], embg_ref[...], embb_ref[...])

    x = x_state[...]                                       # (M, H) f32, VMEM-resident

    # --- fused Q|K|V projection: one bf16 MXU matmul, lane width 3H ----------
    qkv = _bf16_matmul_bias(x, qkv_w_ref, qkv_b_ref)       # (M, 3H) f32

    # --- multi-head attention, batched over the batch dim (3-D einsums) ------
    # Matmuls in bf16 / f32-accumulate; softmax math stays f32.  Only a static
    # unroll over heads remains (heads live in the lane dim of qkv).
    mask = mask_ref[...][:, None, :]                       # (B, 1, S) additive mask
    ctx_heads = []
    for h in range(nh):
        q = qkv[:, h * dh:(h + 1) * dh].reshape(batch, seq, dh)
        k = qkv[:, hid + h * dh:hid + (h + 1) * dh].reshape(batch, seq, dh)
        v = qkv[:, 2 * hid + h * dh:2 * hid + (h + 1) * dh].reshape(batch, seq, dh)
        s = jnp.einsum('bqd,bkd->bqk',
                       q.astype(jnp.bfloat16), k.astype(jnp.bfloat16),
                       preferred_element_type=jnp.float32)         # (B, S, S)
        s = s * scale + mask
        s = s - jnp.max(s, axis=-1, keepdims=True)
        p = jnp.exp(s)
        p = p * pl.reciprocal(jnp.sum(p, axis=-1, keepdims=True), approx=True)
        ctx_heads.append(
            jnp.einsum('bqk,bkd->bqd',
                       p.astype(jnp.bfloat16), v.astype(jnp.bfloat16),
                       preferred_element_type=jnp.float32).reshape(batch * seq, dh))
    ctx = jnp.concatenate(ctx_heads, axis=-1)              # (M, H) dense, in registers

    # --- attention output projection + fused residual + LayerNorm ------------
    attn_out = _bf16_matmul_bias(ctx, ao_w_ref, ao_b_ref)
    h1 = _layernorm(attn_out + x, ln1_g_ref[...], ln1_b_ref[...])

    # --- feed-forward (GELU) + fused residual + LayerNorm ---------------------
    inter = _bf16_matmul_bias(h1, i_w_ref, i_b_ref)
    # TODO(synk): reference BERT uses erf-GELU; tanh approximation used here
    # (EUP-friendly); covered by the tolerance check against the erf reference.
    inter = jax.nn.gelu(inter, approximate=True)
    ffn = _bf16_matmul_bias(inter, o_w_ref, o_b_ref)
    x_new = _layernorm(ffn + h1, ln2_g_ref[...], ln2_b_ref[...])
    x_state[...] = x_new                                   # carries to next grid step

    # --- last grid step: pooler + joint heads, one lane-dense (M,128) store --
    @pl.when(l == pl.num_programs(0) - 1)
    def _():
        # TODO(synk): nn.Dropout(p=0.05) in both classifier heads is identity (eval).
        xb = x_new.astype(jnp.bfloat16)
        pos_part = jnp.dot(xb, posw_ref[...],
                           preferred_element_type=jnp.float32)      # lanes [0,2)
        # Pooler (tanh) + answer-type head computed for every row; the wrapper
        # slices the CLS rows.  At real scale, gather CLS rows first instead.
        pooled = jnp.tanh(_bf16_matmul_bias(x_new, pool_w_ref, pool_b_ref))
        ans_part = jnp.dot(pooled.astype(jnp.bfloat16), answ_ref[...],
                           preferred_element_type=jnp.float32)      # lanes [2,7)
        head_out_ref[...] = (pos_part + ans_part
                             + headb_ref[...]).astype(head_out_ref.dtype)


# ---------------- deterministic parameter init ----------------------------------
def init_params(key):
    keys = iter(jax.random.split(key, 32))

    def w(shape):  # bf16 weights for the MXU
        return (jax.random.normal(next(keys), shape, jnp.float32) * 0.02
                ).astype(jnp.bfloat16)

    def b(shape):  # f32 biases
        return jax.random.normal(next(keys), shape, jnp.float32) * 0.02

    params = {
        "word_emb": jax.random.normal(next(keys), (VOCAB, HIDDEN), jnp.float32) * 0.02,
        "pos_emb": jax.random.normal(next(keys), (MAX_POS, HIDDEN), jnp.float32) * 0.02,
        "type_emb": jax.random.normal(next(keys), (TYPE_VOCAB, HIDDEN), jnp.float32) * 0.02,
        "emb_ln_g": jnp.ones((1, HIDDEN), jnp.float32),
        "emb_ln_b": jnp.zeros((1, HIDDEN), jnp.float32),
        # encoder layers stacked along a leading layer dim (kernel grid walks it)
        "qkv_w": w((NUM_LAYERS, HIDDEN, 3 * HIDDEN)),
        "qkv_b": b((NUM_LAYERS, 1, 3 * HIDDEN)),
        "ao_w": w((NUM_LAYERS, HIDDEN, HIDDEN)),
        "ao_b": b((NUM_LAYERS, 1, HIDDEN)),
        "ln1_g": jnp.ones((NUM_LAYERS, 1, HIDDEN), jnp.float32),
        "ln1_b": jnp.zeros((NUM_LAYERS, 1, HIDDEN), jnp.float32),
        "i_w": w((NUM_LAYERS, HIDDEN, INTERMEDIATE)),
        "i_b": b((NUM_LAYERS, 1, INTERMEDIATE)),
        "o_w": w((NUM_LAYERS, INTERMEDIATE, HIDDEN)),
        "o_b": b((NUM_LAYERS, 1, HIDDEN)),
        "ln2_g": jnp.ones((NUM_LAYERS, 1, HIDDEN), jnp.float32),
        "ln2_b": jnp.zeros((NUM_LAYERS, 1, HIDDEN), jnp.float32),
        # heads
        "pool_w": w((HIDDEN, HIDDEN)),
        "pool_b": b((1, HIDDEN)),
        "pos_w": w((HIDDEN, NUM_POS_CLASSES)),
        "pos_b": b((1, NUM_POS_CLASSES)),
        "ans_w": w((HIDDEN, NUM_ANS_CLASSES)),
        "ans_b": b((1, NUM_ANS_CLASSES)),
    }
    # Lane-dense padded head slabs for the kernel: 2- and 5-wide outputs would
    # lower to masked vst.msk stores, so pack both heads into one 128-lane slab.
    pos_pad = jnp.zeros((HIDDEN, HEAD_LANES), jnp.bfloat16)
    params["pos_w_pad"] = pos_pad.at[:, :NUM_POS_CLASSES].set(params["pos_w"])
    ans_pad = jnp.zeros((HIDDEN, HEAD_LANES), jnp.bfloat16)
    params["ans_w_pad"] = ans_pad.at[
        :, NUM_POS_CLASSES:NUM_POS_CLASSES + NUM_ANS_CLASSES].set(params["ans_w"])
    hb = jnp.zeros((1, HEAD_LANES), jnp.float32)
    hb = hb.at[:, :NUM_POS_CLASSES].set(params["pos_b"])
    hb = hb.at[:, NUM_POS_CLASSES:NUM_POS_CLASSES + NUM_ANS_CLASSES].set(params["ans_b"])
    params["head_b_pad"] = hb
    return params


# ---------------- full forward (BertModel + joint heads) ------------------------
def bert_joint_forward(params, input_ids, attn_masks, token_type_ids):
    B, S = input_ids.shape
    M = B * S

    # Embedding gathers are plain-JAX glue; everything else is one pallas_call.
    pos_ids = jnp.arange(S)
    x_emb = (params["word_emb"][input_ids]
             + params["pos_emb"][pos_ids][None, :, :]
             + params["type_emb"][token_type_ids]).reshape(M, HIDDEN)

    # Additive attention mask (B, S): 0 where attended, -1e9 where masked.
    ext_mask = (1.0 - attn_masks.astype(jnp.float32)) * -1e9

    kern = functools.partial(
        _fused_bert_kernel, batch=B, seq=S, nh=NUM_HEADS, dh=HEAD_DIM,
        scale=1.0 / math.sqrt(HEAD_DIM))

    head_out = pl.pallas_call(
        kern,
        out_shape=jax.ShapeDtypeStruct((M, HEAD_LANES), jnp.float32),
        grid_spec=pltpu.PrefetchScalarGridSpec(
            num_scalar_prefetch=0,
            grid=(NUM_LAYERS,),
            in_specs=[
                _full_spec((M, HIDDEN)),                 # x_emb
                _full_spec((B, S)),                      # ext_mask
                _full_spec((1, HIDDEN)),                 # emb_ln_g
                _full_spec((1, HIDDEN)),                 # emb_ln_b
                _stacked_spec((HIDDEN, 3 * HIDDEN)),     # qkv_w
                _stacked_spec((1, 3 * HIDDEN)),          # qkv_b
                _stacked_spec((HIDDEN, HIDDEN)),         # ao_w
                _stacked_spec((1, HIDDEN)),              # ao_b
                _stacked_spec((1, HIDDEN)),              # ln1_g
                _stacked_spec((1, HIDDEN)),              # ln1_b
                _stacked_spec((HIDDEN, INTERMEDIATE)),   # i_w
                _stacked_spec((1, INTERMEDIATE)),        # i_b
                _stacked_spec((INTERMEDIATE, HIDDEN)),   # o_w
                _stacked_spec((1, HIDDEN)),              # o_b
                _stacked_spec((1, HIDDEN)),              # ln2_g
                _stacked_spec((1, HIDDEN)),              # ln2_b
                _full_spec((HIDDEN, HIDDEN)),            # pool_w
                _full_spec((1, HIDDEN)),                 # pool_b
                _full_spec((HIDDEN, HEAD_LANES)),        # pos_w_pad
                _full_spec((HIDDEN, HEAD_LANES)),        # ans_w_pad
                _full_spec((1, HEAD_LANES)),             # head_b_pad
            ],
            out_specs=_full_spec((M, HEAD_LANES)),
            scratch_shapes=[pltpu.VMEM((M, HIDDEN), jnp.float32)],  # resident x2
        ),
        compiler_params=pltpu.CompilerParams(
            dimension_semantics=("arbitrary",)),         # sequential layer dependency
    )(x_emb, ext_mask, params["emb_ln_g"], params["emb_ln_b"],
      params["qkv_w"], params["qkv_b"], params["ao_w"], params["ao_b"],
      params["ln1_g"], params["ln1_b"], params["i_w"], params["i_b"],
      params["o_w"], params["o_b"], params["ln2_g"], params["ln2_b"],
      params["pool_w"], params["pool_b"],
      params["pos_w_pad"], params["ans_w_pad"], params["head_b_pad"])

    head_out = head_out.reshape(B, S, HEAD_LANES)
    start_logits = head_out[:, :, 0]                      # position logits lane 0
    end_logits = head_out[:, :, 1]                        # position logits lane 1
    ans_logits = head_out[:, 0, NUM_POS_CLASSES:NUM_POS_CLASSES + NUM_ANS_CLASSES]
    return start_logits, end_logits, ans_logits


# ---------------- pure-JAX reference (f32, exact softmax, erf-GELU) -------------
def reference_forward(params, input_ids, attn_masks, token_type_ids):
    B, S = input_ids.shape
    f32 = lambda a: a.astype(jnp.float32)

    def ln(y, g, be):
        mu = jnp.mean(y, axis=-1, keepdims=True)
        yc = y - mu
        var = jnp.mean(yc * yc, axis=-1, keepdims=True)
        return yc / jnp.sqrt(var + LN_EPS) * g + be

    x = (params["word_emb"][input_ids]
         + params["pos_emb"][jnp.arange(S)][None, :, :]
         + params["type_emb"][token_type_ids]).reshape(B * S, HIDDEN)
    h = ln(x, params["emb_ln_g"], params["emb_ln_b"])
    mask = (1.0 - attn_masks.astype(jnp.float32)) * -1e9

    for li in range(NUM_LAYERS):
        qkv = h @ f32(params["qkv_w"][li]) + params["qkv_b"][li]
        ctx = jnp.zeros((B * S, HIDDEN), jnp.float32)
        for bb in range(B):
            rows = qkv[bb * S:(bb + 1) * S]
            for hh in range(NUM_HEADS):
                q = rows[:, hh * HEAD_DIM:(hh + 1) * HEAD_DIM]
                k = rows[:, HIDDEN + hh * HEAD_DIM:HIDDEN + (hh + 1) * HEAD_DIM]
                v = rows[:, 2 * HIDDEN + hh * HEAD_DIM:2 * HIDDEN + (hh + 1) * HEAD_DIM]
                s = q @ k.T / math.sqrt(HEAD_DIM) + mask[bb][None, :]
                p = jax.nn.softmax(s, axis=-1)
                ctx = ctx.at[bb * S:(bb + 1) * S,
                             hh * HEAD_DIM:(hh + 1) * HEAD_DIM].set(p @ v)
        ao = ctx @ f32(params["ao_w"][li]) + params["ao_b"][li]
        h1 = ln(ao + h, params["ln1_g"][li], params["ln1_b"][li])
        inter = jax.nn.gelu(h1 @ f32(params["i_w"][li]) + params["i_b"][li],
                            approximate=False)
        ffn = inter @ f32(params["o_w"][li]) + params["o_b"][li]
        h = ln(ffn + h1, params["ln2_g"][li], params["ln2_b"][li])

    pos_logits = (h @ f32(params["pos_w"]) + params["pos_b"]
                  ).reshape(B, S, NUM_POS_CLASSES)
    cls = h.reshape(B, S, HIDDEN)[:, 0, :]
    pooled = jnp.tanh(cls @ f32(params["pool_w"]) + params["pool_b"])
    ans = pooled @ f32(params["ans_w"]) + params["ans_b"]
    return pos_logits[:, :, 0], pos_logits[:, :, 1], ans


# ---------------- demo --------------------------------------------------------
if __name__ == "__main__":
    B, S = 2, 8
    root = jax.random.PRNGKey(0)
    k_param, k_ids = jax.random.split(root, 2)

    params = init_params(k_param)

    input_ids = jax.random.randint(k_ids, (B, S), 0, VOCAB, dtype=jnp.int32)
    token_type_ids = jnp.concatenate(
        [jnp.zeros((B, S // 2), jnp.int32), jnp.ones((B, S - S // 2), jnp.int32)], axis=1)
    attn_masks = jnp.ones((B, S), jnp.int32).at[1, S - 2:].set(0)  # pad last 2 tokens of batch 1

    fwd = jax.jit(functools.partial(bert_joint_forward, params))
    start_logits, end_logits, ans_logits = fwd(input_ids, attn_masks, token_type_ids)
    jax.block_until_ready((start_logits, end_logits, ans_logits))

    assert start_logits.shape == (B, S)
    assert end_logits.shape == (B, S)
    assert ans_logits.shape == (B, NUM_ANS_CLASSES)

    # Tolerance check against the pure-JAX f32 reference (bf16 MXU matmuls,
    # approx reciprocal and tanh-GELU in the kernel are the only deviations).
    r_start, r_end, r_ans = reference_forward(params, input_ids, attn_masks, token_type_ids)
    for got, ref in ((start_logits, r_start), (end_logits, r_end), (ans_logits, r_ans)):
        err = float(jnp.max(jnp.abs(got - ref)))
        assert err < 5e-2, f"kernel vs reference mismatch: max abs err {err}"

    print("KERNEL_OK")
</pallas_src>

<mosaic_0001>
module attributes {stable_mosaic.version = 11 : i64} {
  func.func @_fused_bert_kernel(%arg0: i32, %arg1: memref<16x32xf32, #tpu.memory_space<vmem>>, %arg2: memref<2x8xf32, #tpu.memory_space<vmem>>, %arg3: memref<1x32xf32, #tpu.memory_space<vmem>>, %arg4: memref<1x32xf32, #tpu.memory_space<vmem>>, %arg5: memref<1x32x96xbf16, #tpu.memory_space<vmem>>, %arg6: memref<1x1x96xf32, #tpu.memory_space<vmem>>, %arg7: memref<1x32x32xbf16, #tpu.memory_space<vmem>>, %arg8: memref<1x1x32xf32, #tpu.memory_space<vmem>>, %arg9: memref<1x1x32xf32, #tpu.memory_space<vmem>>, %arg10: memref<1x1x32xf32, #tpu.memory_space<vmem>>, %arg11: memref<1x32x64xbf16, #tpu.memory_space<vmem>>, %arg12: memref<1x1x64xf32, #tpu.memory_space<vmem>>, %arg13: memref<1x64x32xbf16, #tpu.memory_space<vmem>>, %arg14: memref<1x1x32xf32, #tpu.memory_space<vmem>>, %arg15: memref<1x1x32xf32, #tpu.memory_space<vmem>>, %arg16: memref<1x1x32xf32, #tpu.memory_space<vmem>>, %arg17: memref<32x32xbf16, #tpu.memory_space<vmem>>, %arg18: memref<1x32xf32, #tpu.memory_space<vmem>>, %arg19: memref<32x128xbf16, #tpu.memory_space<vmem>>, %arg20: memref<32x128xbf16, #tpu.memory_space<vmem>>, %arg21: memref<1x128xf32, #tpu.memory_space<vmem>>, %arg22: memref<16x128xf32, #tpu.memory_space<vmem>>, %arg23: memref<16x32xf32, #tpu.memory_space<vmem>>) attributes {dimension_semantics = [#tpu.dimension_semantics<arbitrary>], iteration_bounds = array<i64: 2>, scalar_prefetch = 0 : i64, scratch_operands = 1 : i64, tpu.core_type = #tpu.core_type<tc>, window_params = [{pipeline_mode = #tpu.pipeline_mode<synchronous>, transform_indices = @transform_0, window_bounds = array<i64: 16, 32>}, {pipeline_mode = #tpu.pipeline_mode<synchronous>, transform_indices = @transform_1, window_bounds = array<i64: 2, 8>}, {pipeline_mode = #tpu.pipeline_mode<synchronous>, transform_indices = @transform_2, window_bounds = array<i64: 1, 32>}, {pipeline_mode = #tpu.pipeline_mode<synchronous>, transform_indices = @transform_3, window_bounds = array<i64: 1, 32>}, {transform_indices = @transform_4, window_bounds = array<i64: 1, 32, 96>}, {transform_indices = @transform_5, window_bounds = array<i64: 1, 1, 96>}, {transform_indices = @transform_6, window_bounds = array<i64: 1, 32, 32>}, {transform_indices = @transform_7, window_bounds = array<i64: 1, 1, 32>}, {transform_indices = @transform_8, window_bounds = array<i64: 1, 1, 32>}, {transform_indices = @transform_9, window_bounds = array<i64: 1, 1, 32>}, {transform_indices = @transform_10, window_bounds = array<i64: 1, 32, 64>}, {transform_indices = @transform_11, window_bounds = array<i64: 1, 1, 64>}, {transform_indices = @transform_12, window_bounds = array<i64: 1, 64, 32>}, {transform_indices = @transform_13, window_bounds = array<i64: 1, 1, 32>}, {transform_indices = @transform_14, window_bounds = array<i64: 1, 1, 32>}, {transform_indices = @transform_15, window_bounds = array<i64: 1, 1, 32>}, {pipeline_mode = #tpu.pipeline_mode<synchronous>, transform_indices = @transform_16, window_bounds = array<i64: 32, 32>}, {pipeline_mode = #tpu.pipeline_mode<synchronous>, transform_indices = @transform_17, window_bounds = array<i64: 1, 32>}, {pipeline_mode = #tpu.pipeline_mode<synchronous>, transform_indices = @transform_18, window_bounds = array<i64: 32, 128>}, {pipeline_mode = #tpu.pipeline_mode<synchronous>, transform_indices = @transform_19, window_bounds = array<i64: 32, 128>}, {pipeline_mode = #tpu.pipeline_mode<synchronous>, transform_indices = @transform_20, window_bounds = array<i64: 1, 128>}, {pipeline_mode = #tpu.pipeline_mode<synchronous>, transform_indices = @transform_21, window_bounds = array<i64: 16, 128>}]} {
    %c0_i32 = arith.constant 0 : i32
    %0 = arith.cmpi eq, %arg0, %c0_i32 : i32
    %1 = arith.extui %0 : i1 to i32
    %c0_i32_0 = arith.constant 0 : i32
    %2 = arith.cmpi ne, %1, %c0_i32_0 : i32
    scf.if %2 {
      %c0_70 = arith.constant 0 : index
      %c0_71 = arith.constant 0 : index
      %160 = vector.load %arg1[%c0_70, %c0_71] : memref<16x32xf32, #tpu.memory_space<vmem>>, vector<16x32xf32>
      %c0_72 = arith.constant 0 : index
      %c0_73 = arith.constant 0 : index
      %161 = vector.load %arg3[%c0_72, %c0_73] : memref<1x32xf32, #tpu.memory_space<vmem>>, vector<1x32xf32>
      %c0_74 = arith.constant 0 : index
      %c0_75 = arith.constant 0 : index
      %162 = vector.load %arg4[%c0_74, %c0_75] : memref<1x32xf32, #tpu.memory_space<vmem>>, vector<1x32xf32>
      %cst_76 = arith.constant dense<0.000000e+00> : vector<16xf32>
      %163 = vector.multi_reduction <add>, %160, %cst_76 [1] : vector<16x32xf32> to vector<16xf32>
      %164 = vector.shape_cast %163 : vector<16xf32> to vector<16x1xf32>
      %cst_77 = arith.constant 3.200000e+01 : f32
      %165 = vector.broadcast %cst_77 : f32 to vector<16x1xf32>
      %166 = arith.divf %164, %165 : vector<16x1xf32>
      %167 = vector.broadcast %166 : vector<16x1xf32> to vector<16x32xf32>
      %168 = arith.subf %160, %167 : vector<16x32xf32>
      %169 = arith.mulf %168, %168 : vector<16x32xf32>
      %cst_78 = arith.constant dense<0.000000e+00> : vector<16xf32>
      %170 = vector.multi_reduction <add>, %169, %cst_78 [1] : vector<16x32xf32> to vector<16xf32>
      %171 = vector.shape_cast %170 : vector<16xf32> to vector<16x1xf32>
      %cst_79 = arith.constant 3.200000e+01 : f32
      %172 = vector.broadcast %cst_79 : f32 to vector<16x1xf32>
      %173 = arith.divf %171, %172 : vector<16x1xf32>
      %cst_80 = arith.constant 9.99999996E-13 : f32
      %174 = vector.broadcast %cst_80 : f32 to vector<16x1xf32>
      %175 = arith.addf %173, %174 : vector<16x1xf32>
      %176 = math.rsqrt %175 : vector<16x1xf32>
      %177 = vector.broadcast %176 : vector<16x1xf32> to vector<16x32xf32>
      %178 = arith.mulf %168, %177 : vector<16x32xf32>
      %179 = vector.broadcast %161 : vector<1x32xf32> to vector<16x32xf32>
      %180 = arith.mulf %178, %179 : vector<16x32xf32>
      %181 = vector.broadcast %162 : vector<1x32xf32> to vector<16x32xf32>
      %182 = arith.addf %180, %181 : vector<16x32xf32>
      %c0_81 = arith.constant 0 : index
      %c0_82 = arith.constant 0 : index
      %183 = vector.load %arg23[%c0_81, %c0_82] : memref<16x32xf32, #tpu.memory_space<vmem>>, vector<16x32xf32>
      tpu.vector_store %arg23[%c0_81, %c0_82], %182 {strides = array<i32>} : memref<16x32xf32, #tpu.memory_space<vmem>>, vector<16x32xf32>,
    } else {
    }
    %c0 = arith.constant 0 : index
    %c0_1 = arith.constant 0 : index
    %3 = vector.load %arg23[%c0, %c0_1] : memref<16x32xf32, #tpu.memory_space<vmem>>, vector<16x32xf32>
    %4 = arith.truncf %3 : vector<16x32xf32> to vector<16x32xbf16>
    %c0_2 = arith.constant 0 : index
    %c0_3 = arith.constant 0 : index
    %c0_4 = arith.constant 0 : index
    %5 = vector.load %arg5[%c0_2, %c0_3, %c0_4] : memref<1x32x96xbf16, #tpu.memory_space<vmem>>, vector<1x32x96xbf16>
    %6 = vector.shape_cast %5 : vector<1x32x96xbf16> to vector<32x96xbf16>
    %cst = arith.constant dense<0.000000e+00> : vector<16x96xf32>
    %7 = tpu.matmul %4, %6, %cst {dimension_numbers = #tpu.dot_dimension_numbers<[1], [0], [0], [1], [0, 0, 1, 1], [], []>} : vector<16x32xbf16>, vector<32x96xbf16>, vector<16x96xf32> -> vector<16x96xf32>
    %c0_5 = arith.constant 0 : index
    %c0_6 = arith.constant 0 : index
    %c0_7 = arith.constant 0 : index
    %8 = vector.load %arg6[%c0_5, %c0_6, %c0_7] : memref<1x1x96xf32, #tpu.memory_space<vmem>>, vector<1x1x96xf32>
    %9 = vector.shape_cast %8 : vector<1x1x96xf32> to vector<1x96xf32>
    %10 = vector.broadcast %9 : vector<1x96xf32> to vector<16x96xf32>
    %11 = arith.addf %7, %10 : vector<16x96xf32>
    %c0_8 = arith.constant 0 : index
    %c0_9 = arith.constant 0 : index
    %12 = vector.load %arg2[%c0_8, %c0_9] : memref<2x8xf32, #tpu.memory_space<vmem>>, vector<2x8xf32>
    %13 = vector.shape_cast %12 : vector<2x8xf32> to vector<2x1x8xf32>
    %14 = vector.extract_strided_slice %11 {offsets = [0, 0], sizes = [16, 16], strides = [1, 1]} : vector<16x96xf32> to vector<16x16xf32>
    %15 = vector.shape_cast %14 : vector<16x16xf32> to vector<2x8x16xf32>
    %16 = vector.extract_strided_slice %11 {offsets = [0, 32], sizes = [16, 16], strides = [1, 1]} : vector<16x96xf32> to vector<16x16xf32>
    %17 = vector.shape_cast %16 : vector<16x16xf32> to vector<2x8x16xf32>
    %18 = vector.extract_strided_slice %11 {offsets = [0, 64], sizes = [16, 16], strides = [1, 1]} : vector<16x96xf32> to vector<16x16xf32>
    %19 = vector.shape_cast %18 : vector<16x16xf32> to vector<2x8x16xf32>
    %20 = arith.truncf %15 : vector<2x8x16xf32> to vector<2x8x16xbf16>
    %21 = arith.truncf %17 : vector<2x8x16xf32> to vector<2x8x16xbf16>
    "tpu.trace_start"() <{level = 10 : i32, message = "bqd,bkd->bqk"}> : () -> ()
    %cst_10 = arith.constant dense<0.000000e+00> : vector<2x8x8xf32>
    %22 = tpu.matmul %20, %21, %cst_10 {dimension_numbers = #tpu.dot_dimension_numbers<[2], [2], [1], [1], [0, 0, 0, 1, 1, 1], [0], [0]>} : vector<2x8x16xbf16>, vector<2x8x16xbf16>, vector<2x8x8xf32> -> vector<2x8x8xf32>
    "tpu.trace_stop"() : () -> ()
    %cst_11 = arith.constant 2.500000e-01 : f32
    %23 = vector.broadcast %cst_11 : f32 to vector<2x8x8xf32>
    %24 = arith.mulf %22, %23 : vector<2x8x8xf32>
    %25 = vector.broadcast %13 : vector<2x1x8xf32> to vector<2x8x8xf32>
    %26 = arith.addf %24, %25 : vector<2x8x8xf32>
    %cst_12 = arith.constant dense<0xFF800000> : vector<2x8xf32>
    %27 = vector.multi_reduction <maximumf>, %26, %cst_12 [2] : vector<2x8x8xf32> to vector<2x8xf32>
    %28 = vector.shape_cast %27 : vector<2x8xf32> to vector<2x8x1xf32>
    %29 = vector.broadcast %28 : vector<2x8x1xf32> to vector<2x8x8xf32>
    %30 = arith.subf %26, %29 : vector<2x8x8xf32>
    %31 = math.exp %30 : vector<2x8x8xf32>
    %cst_13 = arith.constant dense<0.000000e+00> : vector<2x8xf32>
    %32 = vector.multi_reduction <add>, %31, %cst_13 [2] : vector<2x8x8xf32> to vector<2x8xf32>
    %33 = vector.shape_cast %32 : vector<2x8xf32> to vector<2x8x1xf32>
    %34 = tpu.reciprocal %33 {approx = true} : vector<2x8x1xf32> -> vector<2x8x1xf32>
    %35 = vector.broadcast %34 : vector<2x8x1xf32> to vector<2x8x8xf32>
    %36 = arith.mulf %31, %35 : vector<2x8x8xf32>
    %37 = arith.truncf %36 : vector<2x8x8xf32> to vector<2x8x8xbf16>
    %38 = arith.truncf %19 : vector<2x8x16xf32> to vector<2x8x16xbf16>
    "tpu.trace_start"() <{level = 10 : i32, message = "bqk,bkd->bqd"}> : () -> ()
    %cst_14 = arith.constant dense<0.000000e+00> : vector<2x8x16xf32>
    %39 = tpu.matmul %37, %38, %cst_14 {dimension_numbers = #tpu.dot_dimension_numbers<[2], [1], [1], [2], [0, 0, 0, 1, 1, 2], [0], [0]>} : vector<2x8x8xbf16>, vector<2x8x16xbf16>, vector<2x8x16xf32> -> vector<2x8x16xf32>
    "tpu.trace_stop"() : () -> ()
    %40 = vector.shape_cast %39 : vector<2x8x16xf32> to vector<16x16xf32>
    %41 = vector.extract_strided_slice %11 {offsets = [0, 16], sizes = [16, 16], strides = [1, 1]} : vector<16x96xf32> to vector<16x16xf32>
    %42 = vector.shape_cast %41 : vector<16x16xf32> to vector<2x8x16xf32>
    %43 = vector.extract_strided_slice %11 {offsets = [0, 48], sizes = [16, 16], strides = [1, 1]} : vector<16x96xf32> to vector<16x16xf32>
    %44 = vector.shape_cast %43 : vector<16x16xf32> to vector<2x8x16xf32>
    %45 = vector.extract_strided_slice %11 {offsets = [0, 80], sizes = [16, 16], strides = [1, 1]} : vector<16x96xf32> to vector<16x16xf32>
    %46 = vector.shape_cast %45 : vector<16x16xf32> to vector<2x8x16xf32>
    %47 = arith.truncf %42 : vector<2x8x16xf32> to vector<2x8x16xbf16>
    %48 = arith.truncf %44 : vector<2x8x16xf32> to vector<2x8x16xbf16>
    "tpu.trace_start"() <{level = 10 : i32, message = "bqd,bkd->bqk"}> : () -> ()
    %cst_15 = arith.constant dense<0.000000e+00> : vector<2x8x8xf32>
    %49 = tpu.matmul %47, %48, %cst_15 {dimension_numbers = #tpu.dot_dimension_numbers<[2], [2], [1], [1], [0, 0, 0, 1, 1, 1], [0], [0]>} : vector<2x8x16xbf16>, vector<2x8x16xbf16>, vector<2x8x8xf32> -> vector<2x8x8xf32>
    "tpu.trace_stop"() : () -> ()
    %cst_16 = arith.constant 2.500000e-01 : f32
    %50 = vector.broadcast %cst_16 : f32 to vector<2x8x8xf32>
    %51 = arith.mulf %49, %50 : vector<2x8x8xf32>
    %52 = vector.broadcast %13 : vector<2x1x8xf32> to vector<2x8x8xf32>
    %53 = arith.addf %51, %52 : vector<2x8x8xf32>
    %cst_17 = arith.constant dense<0xFF800000> : vector<2x8xf32>
    %54 = vector.multi_reduction <maximumf>, %53, %cst_17 [2] : vector<2x8x8xf32> to vector<2x8xf32>
    %55 = vector.shape_cast %54 : vector<2x8xf32> to vector<2x8x1xf32>
    %56 = vector.broadcast %55 : vector<2x8x1xf32> to vector<2x8x8xf32>
    %57 = arith.subf %53, %56 : vector<2x8x8xf32>
    %58 = math.exp %57 : vector<2x8x8xf32>
    %cst_18 = arith.constant dense<0.000000e+00> : vector<2x8xf32>
    %59 = vector.multi_reduction <add>, %58, %cst_18 [2] : vector<2x8x8xf32> to vector<2x8xf32>
    %60 = vector.shape_cast %59 : vector<2x8xf32> to vector<2x8x1xf32>
    %61 = tpu.reciprocal %60 {approx = true} : vector<2x8x1xf32> -> vector<2x8x1xf32>
    %62 = vector.broadcast %61 : vector<2x8x1xf32> to vector<2x8x8xf32>
    %63 = arith.mulf %58, %62 : vector<2x8x8xf32>
    %64 = arith.truncf %63 : vector<2x8x8xf32> to vector<2x8x8xbf16>
    %65 = arith.truncf %46 : vector<2x8x16xf32> to vector<2x8x16xbf16>
    "tpu.trace_start"() <{level = 10 : i32, message = "bqk,bkd->bqd"}> : () -> ()
    %cst_19 = arith.constant dense<0.000000e+00> : vector<2x8x16xf32>
    %66 = tpu.matmul %64, %65, %cst_19 {dimension_numbers = #tpu.dot_dimension_numbers<[2], [1], [1], [2], [0, 0, 0, 1, 1, 2], [0], [0]>} : vector<2x8x8xbf16>, vector<2x8x16xbf16>, vector<2x8x16xf32> -> vector<2x8x16xf32>
    "tpu.trace_stop"() : () -> ()
    %67 = vector.shape_cast %66 : vector<2x8x16xf32> to vector<16x16xf32>
    %68 = tpu.concatenate %40, %67 in 1 : vector<16x16xf32>, vector<16x16xf32> -> vector<16x32xf32>
    %69 = arith.truncf %68 : vector<16x32xf32> to vector<16x32xbf16>
    %c0_20 = arith.constant 0 : index
    %c0_21 = arith.constant 0 : index
    %c0_22 = arith.constant 0 : index
    %70 = vector.load %arg7[%c0_20, %c0_21, %c0_22] : memref<1x32x32xbf16, #tpu.memory_space<vmem>>, vector<1x32x32xbf16>
    %71 = vector.shape_cast %70 : vector<1x32x32xbf16> to vector<32x32xbf16>
    %cst_23 = arith.constant dense<0.000000e+00> : vector<16x32xf32>
    %72 = tpu.matmul %69, %71, %cst_23 {dimension_numbers = #tpu.dot_dimension_numbers<[1], [0], [0], [1], [0, 0, 1, 1], [], []>} : vector<16x32xbf16>, vector<32x32xbf16>, vector<16x32xf32> -> vector<16x32xf32>
    %c0_24 = arith.constant 0 : index
    %c0_25 = arith.constant 0 : index
    %c0_26 = arith.constant 0 : index
    %73 = vector.load %arg8[%c0_24, %c0_25, %c0_26] : memref<1x1x32xf32, #tpu.memory_space<vmem>>, vector<1x1x32xf32>
    %74 = vector.shape_cast %73 : vector<1x1x32xf32> to vector<1x32xf32>
    %75 = vector.broadcast %74 : vector<1x32xf32> to vector<16x32xf32>
    %76 = arith.addf %72, %75 : vector<16x32xf32>
    %77 = arith.addf %76, %3 : vector<16x32xf32>
    %c0_27 = arith.constant 0 : index
    %c0_28 = arith.constant 0 : index
    %c0_29 = arith.constant 0 : index
    %78 = vector.load %arg9[%c0_27, %c0_28, %c0_29] : memref<1x1x32xf32, #tpu.memory_space<vmem>>, vector<1x1x32xf32>
    %79 = vector.shape_cast %78 : vector<1x1x32xf32> to vector<1x32xf32>
    %c0_30 = arith.constant 0 : index
    %c0_31 = arith.constant 0 : index
    %c0_32 = arith.constant 0 : index
    %80 = vector.load %arg10[%c0_30, %c0_31, %c0_32] : memref<1x1x32xf32, #tpu.memory_space<vmem>>, vector<1x1x32xf32>
    %81 = vector.shape_cast %80 : vector<1x1x32xf32> to vector<1x32xf32>
    %cst_33 = arith.constant dense<0.000000e+00> : vector<16xf32>
    %82 = vector.multi_reduction <add>, %77, %cst_33 [1] : vector<16x32xf32> to vector<16xf32>
    %83 = vector.shape_cast %82 : vector<16xf32> to vector<16x1xf32>
    %cst_34 = arith.constant 3.200000e+01 : f32
    %84 = vector.broadcast %cst_34 : f32 to vector<16x1xf32>
    %85 = arith.divf %83, %84 : vector<16x1xf32>
    %86 = vector.broadcast %85 : vector<16x1xf32> to vector<16x32xf32>
    %87 = arith.subf %77, %86 : vector<16x32xf32>
    %88 = arith.mulf %87, %87 : vector<16x32xf32>
    %cst_35 = arith.constant dense<0.000000e+00> : vector<16xf32>
    %89 = vector.multi_reduction <add>, %88, %cst_35 [1] : vector<16x32xf32> to vector<16xf32>
    %90 = vector.shape_cast %89 : vector<16xf32> to vector<16x1xf32>
    %cst_36 = arith.constant 3.200000e+01 : f32
    %91 = vector.broadcast %cst_36 : f32 to vector<16x1xf32>
    %92 = arith.divf %90, %91 : vector<16x1xf32>
    %cst_37 = arith.constant 9.99999996E-13 : f32
    %93 = vector.broadcast %cst_37 : f32 to vector<16x1xf32>
    %94 = arith.addf %92, %93 : vector<16x1xf32>
    %95 = math.rsqrt %94 : vector<16x1xf32>
    %96 = vector.broadcast %95 : vector<16x1xf32> to vector<16x32xf32>
    %97 = arith.mulf %87, %96 : vector<16x32xf32>
    %98 = vector.broadcast %79 : vector<1x32xf32> to vector<16x32xf32>
    %99 = arith.mulf %97, %98 : vector<16x32xf32>
    %100 = vector.broadcast %81 : vector<1x32xf32> to vector<16x32xf32>
    %101 = arith.addf %99, %100 : vector<16x32xf32>
    %102 = arith.truncf %101 : vector<16x32xf32> to vector<16x32xbf16>
    %c0_38 = arith.constant 0 : index
    %c0_39 = arith.constant 0 : index
    %c0_40 = arith.constant 0 : index
    %103 = vector.load %arg11[%c0_38, %c0_39, %c0_40] : memref<1x32x64xbf16, #tpu.memory_space<vmem>>, vector<1x32x64xbf16>
    %104 = vector.shape_cast %103 : vector<1x32x64xbf16> to vector<32x64xbf16>
    %cst_41 = arith.constant dense<0.000000e+00> : vector<16x64xf32>
    %105 = tpu.matmul %102, %104, %cst_41 {dimension_numbers = #tpu.dot_dimension_numbers<[1], [0], [0], [1], [0, 0, 1, 1], [], []>} : vector<16x32xbf16>, vector<32x64xbf16>, vector<16x64xf32> -> vector<16x64xf32>
    %c0_42 = arith.constant 0 : index
    %c0_43 = arith.constant 0 : index
    %c0_44 = arith.constant 0 : index
    %106 = vector.load %arg12[%c0_42, %c0_43, %c0_44] : memref<1x1x64xf32, #tpu.memory_space<vmem>>, vector<1x1x64xf32>
    %107 = vector.shape_cast %106 : vector<1x1x64xf32> to vector<1x64xf32>
    %108 = vector.broadcast %107 : vector<1x64xf32> to vector<16x64xf32>
    %109 = arith.addf %105, %108 : vector<16x64xf32>
    %110 = arith.mulf %109, %109 : vector<16x64xf32>
    %111 = arith.mulf %109, %110 : vector<16x64xf32>
    %cst_45 = arith.constant 4.471500e-02 : f32
    %112 = vector.broadcast %cst_45 : f32 to vector<16x64xf32>
    %113 = arith.mulf %112, %111 : vector<16x64xf32>
    %114 = arith.addf %109, %113 : vector<16x64xf32>
    %cst_46 = arith.constant 0.797884583 : f32
    %115 = vector.broadcast %cst_46 : f32 to vector<16x64xf32>
    %116 = arith.mulf %115, %114 : vector<16x64xf32>
    %117 = math.tanh %116 : vector<16x64xf32>
    %cst_47 = arith.constant 1.000000e+00 : f32
    %118 = vector.broadcast %cst_47 : f32 to vector<16x64xf32>
    %119 = arith.addf %118, %117 : vector<16x64xf32>
    %cst_48 = arith.constant 5.000000e-01 : f32
    %120 = vector.broadcast %cst_48 : f32 to vector<16x64xf32>
    %121 = arith.mulf %120, %119 : vector<16x64xf32>
    %122 = arith.mulf %109, %121 : vector<16x64xf32>
    %123 = arith.truncf %122 : vector<16x64xf32> to vector<16x64xbf16>
    %c0_49 = arith.constant 0 : index
    %c0_50 = arith.constant 0 : index
    %c0_51 = arith.constant 0 : index
    %124 = vector.load %arg13[%c0_49, %c0_50, %c0_51] : memref<1x64x32xbf16, #tpu.memory_space<vmem>>, vector<1x64x32xbf16>
    %125 = vector.shape_cast %124 : vector<1x64x32xbf16> to vector<64x32xbf16>
    %cst_52 = arith.constant dense<0.000000e+00> : vector<16x32xf32>
    %126 = tpu.matmul %123, %125, %cst_52 {dimension_numbers = #tpu.dot_dimension_numbers<[1], [0], [0], [1], [0, 0, 1, 1], [], []>} : vector<16x64xbf16>, vector<64x32xbf16>, vector<16x32xf32> -> vector<16x32xf32>
    %c0_53 = arith.constant 0 : index
    %c0_54 = arith.constant 0 : index
    %c0_55 = arith.constant 0 : index
    %127 = vector.load %arg14[%c0_53, %c0_54, %c0_55] : memref<1x1x32xf32, #tpu.memory_space<vmem>>, vector<1x1x32xf32>
    %128 = vector.shape_cast %127 : vector<1x1x32xf32> to vector<1x32xf32>
    %129 = vector.broadcast %128 : vector<1x32xf32> to vector<16x32xf32>
    %130 = arith.addf %126, %129 : vector<16x32xf32>
    %131 = arith.addf %130, %101 : vector<16x32xf32>
    %c0_56 = arith.constant 0 : index
    %c0_57 = arith.constant 0 : index
    %c0_58 = arith.constant 0 : index
    %132 = vector.load %arg15[%c0_56, %c0_57, %c0_58] : memref<1x1x32xf32, #tpu.memory_space<vmem>>, vector<1x1x32xf32>
    %133 = vector.shape_cast %132 : vector<1x1x32xf32> to vector<1x32xf32>
    %c0_59 = arith.constant 0 : index
    %c0_60 = arith.constant 0 : index
    %c0_61 = arith.constant 0 : index
    %134 = vector.load %arg16[%c0_59, %c0_60, %c0_61] : memref<1x1x32xf32, #tpu.memory_space<vmem>>, vector<1x1x32xf32>
    %135 = vector.shape_cast %134 : vector<1x1x32xf32> to vector<1x32xf32>
    %cst_62 = arith.constant dense<0.000000e+00> : vector<16xf32>
    %136 = vector.multi_reduction <add>, %131, %cst_62 [1] : vector<16x32xf32> to vector<16xf32>
    %137 = vector.shape_cast %136 : vector<16xf32> to vector<16x1xf32>
    %cst_63 = arith.constant 3.200000e+01 : f32
    %138 = vector.broadcast %cst_63 : f32 to vector<16x1xf32>
    %139 = arith.divf %137, %138 : vector<16x1xf32>
    %140 = vector.broadcast %139 : vector<16x1xf32> to vector<16x32xf32>
    %141 = arith.subf %131, %140 : vector<16x32xf32>
    %142 = arith.mulf %141, %141 : vector<16x32xf32>
    %cst_64 = arith.constant dense<0.000000e+00> : vector<16xf32>
    %143 = vector.multi_reduction <add>, %142, %cst_64 [1] : vector<16x32xf32> to vector<16xf32>
    %144 = vector.shape_cast %143 : vector<16xf32> to vector<16x1xf32>
    %cst_65 = arith.constant 3.200000e+01 : f32
    %145 = vector.broadcast %cst_65 : f32 to vector<16x1xf32>
    %146 = arith.divf %144, %145 : vector<16x1xf32>
    %cst_66 = arith.constant 9.99999996E-13 : f32
    %147 = vector.broadcast %cst_66 : f32 to vector<16x1xf32>
    %148 = arith.addf %146, %147 : vector<16x1xf32>
    %149 = math.rsqrt %148 : vector<16x1xf32>
    %150 = vector.broadcast %149 : vector<16x1xf32> to vector<16x32xf32>
    %151 = arith.mulf %141, %150 : vector<16x32xf32>
    %152 = vector.broadcast %133 : vector<1x32xf32> to vector<16x32xf32>
    %153 = arith.mulf %151, %152 : vector<16x32xf32>
    %154 = vector.broadcast %135 : vector<1x32xf32> to vector<16x32xf32>
    %155 = arith.addf %153, %154 : vector<16x32xf32>
    %c0_67 = arith.constant 0 : index
    %c0_68 = arith.constant 0 : index
    %156 = vector.load %arg23[%c0_67, %c0_68] : memref<16x32xf32, #tpu.memory_space<vmem>>, vector<16x32xf32>
    tpu.vector_store %arg23[%c0_67, %c0_68], %155 {strides = array<i32>} : memref<16x32xf32, #tpu.memory_space<vmem>>, vector<16x32xf32>,
    %c1_i32 = arith.constant 1 : i32
    %157 = arith.cmpi eq, %arg0, %c1_i32 : i32
    %158 = arith.extui %157 : i1 to i32
    %c0_i32_69 = arith.constant 0 : i32
    %159 = arith.cmpi ne, %158, %c0_i32_69 : i32
    scf.if %159 {
      %160 = arith.truncf %155 : vector<16x32xf32> to vector<16x32xbf16>
      %c0_70 = arith.constant 0 : index
      %c0_71 = arith.constant 0 : index
      %161 = vector.load %arg19[%c0_70, %c0_71] : memref<32x128xbf16, #tpu.memory_space<vmem>>, vector<32x128xbf16>
      %cst_72 = arith.constant dense<0.000000e+00> : vector<16x128xf32>
      %162 = tpu.matmul %160, %161, %cst_72 {dimension_numbers = #tpu.dot_dimension_numbers<[1], [0], [0], [1], [0, 0, 1, 1], [], []>} : vector<16x32xbf16>, vector<32x128xbf16>, vector<16x128xf32> -> vector<16x128xf32>
      %163 = arith.truncf %155 : vector<16x32xf32> to vector<16x32xbf16>
      %c0_73 = arith.constant 0 : index
      %c0_74 = arith.constant 0 : index
      %164 = vector.load %arg17[%c0_73, %c0_74] : memref<32x32xbf16, #tpu.memory_space<vmem>>, vector<32x32xbf16>
      %cst_75 = arith.constant dense<0.000000e+00> : vector<16x32xf32>
      %165 = tpu.matmul %163, %164, %cst_75 {dimension_numbers = #tpu.dot_dimension_numbers<[1], [0], [0], [1], [0, 0, 1, 1], [], []>} : vector<16x32xbf16>, vector<32x32xbf16>, vector<16x32xf32> -> vector<16x32xf32>
      %c0_76 = arith.constant 0 : index
      %c0_77 = arith.constant 0 : index
      %166 = vector.load %arg18[%c0_76, %c0_77] : memref<1x32xf32, #tpu.memory_space<vmem>>, vector<1x32xf32>
      %167 = vector.broadcast %166 : vector<1x32xf32> to vector<16x32xf32>
      %168 = arith.addf %165, %167 : vector<16x32xf32>
      %169 = math.tanh %168 : vector<16x32xf32>
      %170 = arith.truncf %169 : vector<16x32xf32> to vector<16x32xbf16>
      %c0_78 = arith.constant 0 : index
      %c0_79 = arith.constant 0 : index
      %171 = vector.load %arg20[%c0_78, %c0_79] : memref<32x128xbf16, #tpu.memory_space<vmem>>, vector<32x128xbf16>
      %cst_80 = arith.constant dense<0.000000e+00> : vector<16x128xf32>
      %172 = tpu.matmul %170, %171, %cst_80 {dimension_numbers = #tpu.dot_dimension_numbers<[1], [0], [0], [1], [0, 0, 1, 1], [], []>} : vector<16x32xbf16>, vector<32x128xbf16>, vector<16x128xf32> -> vector<16x128xf32>
      %173 = arith.addf %162, %172 : vector<16x128xf32>
      %c0_81 = arith.constant 0 : index
      %c0_82 = arith.constant 0 : index
      %174 = vector.load %arg21[%c0_81, %c0_82] : memref<1x128xf32, #tpu.memory_space<vmem>>, vector<1x128xf32>
      %175 = vector.broadcast %174 : vector<1x128xf32> to vector<16x128xf32>
      %176 = arith.addf %173, %175 : vector<16x128xf32>
      %c0_83 = arith.constant 0 : index
      %c0_84 = arith.constant 0 : index
      %177 = vector.load %arg22[%c0_83, %c0_84] : memref<16x128xf32, #tpu.memory_space<vmem>>, vector<16x128xf32>
      tpu.vector_store %arg22[%c0_83, %c0_84], %176 {strides = array<i32>} : memref<16x128xf32, #tpu.memory_space<vmem>>, vector<16x128xf32>,
    } else {
    }
    return
  }
  func.func @transform_0(%arg0: i32) -> (i32, i32) {
    %c0_i32 = arith.constant 0 : i32
    %c0_i32_0 = arith.constant 0 : i32
    %c0_i32_1 = arith.constant 0 : i32
    return %c0_i32, %c0_i32_0 : i32, i32
  }
  func.func @transform_1(%arg0: i32) -> (i32, i32) {
    %c0_i32 = arith.constant 0 : i32
    %c0_i32_0 = arith.constant 0 : i32
    %c0_i32_1 = arith.constant 0 : i32
    return %c0_i32, %c0_i32_0 : i32, i32
  }
  func.func @transform_2(%arg0: i32) -> (i32, i32) {
    %c0_i32 = arith.constant 0 : i32
    %c0_i32_0 = arith.constant 0 : i32
    %c0_i32_1 = arith.constant 0 : i32
    return %c0_i32, %c0_i32_0 : i32, i32
  }
  func.func @transform_3(%arg0: i32) -> (i32, i32) {
    %c0_i32 = arith.constant 0 : i32
    %c0_i32_0 = arith.constant 0 : i32
    %c0_i32_1 = arith.constant 0 : i32
    return %c0_i32, %c0_i32_0 : i32, i32
  }
  func.func @transform_4(%arg0: i32) -> (i32, i32, i32) {
    %c0_i32 = arith.constant 0 : i32
    %c0_i32_0 = arith.constant 0 : i32
    %c0_i32_1 = arith.constant 0 : i32
    return %arg0, %c0_i32, %c0_i32_0 : i32, i32, i32
  }
  func.func @transform_5(%arg0: i32) -> (i32, i32, i32) {
    %c0_i32 = arith.constant 0 : i32
    %c0_i32_0 = arith.constant 0 : i32
    %c0_i32_1 = arith.constant 0 : i32
    return %arg0, %c0_i32, %c0_i32_0 : i32, i32, i32
  }
  func.func @transform_6(%arg0: i32) -> (i32, i32, i32) {
    %c0_i32 = arith.constant 0 : i32
    %c0_i32_0 = arith.constant 0 : i32
    %c0_i32_1 = arith.constant 0 : i32
    return %arg0, %c0_i32, %c0_i32_0 : i32, i32, i32
  }
  func.func @transform_7(%arg0: i32) -> (i32, i32, i32) {
    %c0_i32 = arith.constant 0 : i32
    %c0_i32_0 = arith.constant 0 : i32
    %c0_i32_1 = arith.constant 0 : i32
    return %arg0, %c0_i32, %c0_i32_0 : i32, i32, i32
  }
  func.func @transform_8(%arg0: i32) -> (i32, i32, i32) {
    %c0_i32 = arith.constant 0 : i32
    %c0_i32_0 = arith.constant 0 : i32
    %c0_i32_1 = arith.constant 0 : i32
    return %arg0, %c0_i32, %c0_i32_0 : i32, i32, i32
  }
  func.func @transform_9(%arg0: i32) -> (i32, i32, i32) {
    %c0_i32 = arith.constant 0 : i32
    %c0_i32_0 = arith.constant 0 : i32
    %c0_i32_1 = arith.constant 0 : i32
    return %arg0, %c0_i32, %c0_i32_0 : i32, i32, i32
  }
  func.func @transform_10(%arg0: i32) -> (i32, i32, i32) {
    %c0_i32 = arith.constant 0 : i32
    %c0_i32_0 = arith.constant 0 : i32
    %c0_i32_1 = arith.constant 0 : i32
    return %arg0, %c0_i32, %c0_i32_0 : i32, i32, i32
  }
  func.func @transform_11(%arg0: i32) -> (i32, i32, i32) {
    %c0_i32 = arith.constant 0 : i32
    %c0_i32_0 = arith.constant 0 : i32
    %c0_i32_1 = arith.constant 0 : i32
    return %arg0, %c0_i32, %c0_i32_0 : i32, i32, i32
  }
  func.func @transform_12(%arg0: i32) -> (i32, i32, i32) {
    %c0_i32 = arith.constant 0 : i32
    %c0_i32_0 = arith.constant 0 : i32
    %c0_i32_1 = arith.constant 0 : i32
    return %arg0, %c0_i32, %c0_i32_0 : i32, i32, i32
  }
  func.func @transform_13(%arg0: i32) -> (i32, i32, i32) {
    %c0_i32 = arith.constant 0 : i32
    %c0_i32_0 = arith.constant 0 : i32
    %c0_i32_1 = arith.constant 0 : i32
    return %arg0, %c0_i32, %c0_i32_0 : i32, i32, i32
  }
  func.func @transform_14(%arg0: i32) -> (i32, i32, i32) {
    %c0_i32 = arith.constant 0 : i32
    %c0_i32_0 = arith.constant 0 : i32
    %c0_i32_1 = arith.constant 0 : i32
    return %arg0, %c0_i32, %c0_i32_0 : i32, i32, i32
  }
  func.func @transform_15(%arg0: i32) -> (i32, i32, i32) {
    %c0_i32 = arith.constant 0 : i32
    %c0_i32_0 = arith.constant 0 : i32
    %c0_i32_1 = arith.constant 0 : i32
    return %arg0, %c0_i32, %c0_i32_0 : i32, i32, i32
  }
  func.func @transform_16(%arg0: i32) -> (i32, i32) {
    %c0_i32 = arith.constant 0 : i32
    %c0_i32_0 = arith.constant 0 : i32
    %c0_i32_1 = arith.constant 0 : i32
    return %c0_i32, %c0_i32_0 : i32, i32
  }
  func.func @transform_17(%arg0: i32) -> (i32, i32) {
    %c0_i32 = arith.constant 0 : i32
    %c0_i32_0 = arith.constant 0 : i32
    %c0_i32_1 = arith.constant 0 : i32
    return %c0_i32, %c0_i32_0 : i32, i32
  }
  func.func @transform_18(%arg0: i32) -> (i32, i32) {
    %c0_i32 = arith.constant 0 : i32
    %c0_i32_0 = arith.constant 0 : i32
    %c0_i32_1 = arith.constant 0 : i32
    return %c0_i32, %c0_i32_0 : i32, i32
  }
  func.func @transform_19(%arg0: i32) -> (i32, i32) {
    %c0_i32 = arith.constant 0 : i32
    %c0_i32_0 = arith.constant 0 : i32
    %c0_i32_1 = arith.constant 0 : i32
    return %c0_i32, %c0_i32_0 : i32, i32
  }
  func.func @transform_20(%arg0: i32) -> (i32, i32) {
    %c0_i32 = arith.constant 0 : i32
    %c0_i32_0 = arith.constant 0 : i32
    %c0_i32_1 = arith.constant 0 : i32
    return %c0_i32, %c0_i32_0 : i32, i32
  }
  func.func @transform_21(%arg0: i32) -> (i32, i32) {
    %c0_i32 = arith.constant 0 : i32
    %c0_i32_0 = arith.constant 0 : i32
    %c0_i32_1 = arith.constant 0 : i32
    return %c0_i32, %c0_i32_0 : i32, i32
  }
}

</mosaic_0001>

<llo_original>
// kernel: bert_joint_forward.1
$region0: #{bert_joint_forward.1}
  #allocation0 [shape = 'u32[]', space=smem, size = 0x4, offset = 0x4, fixed_abs, tag = 'smem constant byte address 0x4 - core index']
  #allocation1 [shape = 'u32[144,128]{1,0:T(1,128)}', space=vmem, size = 0x12000, scoped, tag = 'internal scratch']
  #allocation2 [shape = 'f32[16,32]{1,0:T(8,128)}', space=vmem, size = 0x2000, scoped, tag = 'scratch operand']
  %s0 = inlined_call_operand.vmem [shape: f32[16,32], index: 0, kind: input, shape index: {}]
  %s1 = inlined_call_operand.vmem [shape: f32[2,8], index: 1, kind: input, shape index: {}]
  %s2 = inlined_call_operand.vmem [shape: f32[1,32], index: 2, kind: input, shape index: {}]
  %s3 = inlined_call_operand.vmem [shape: f32[1,32], index: 3, kind: input, shape index: {}]
  %s4 = inlined_call_operand.vmem [shape: bf16[2,32,96], index: 4, kind: input, shape index: {}]
  %s5 = inlined_call_operand.vmem [shape: f32[2,1,96], index: 5, kind: input, shape index: {}]
  %s6 = inlined_call_operand.vmem [shape: bf16[2,32,32], index: 6, kind: input, shape index: {}]
  %s7 = inlined_call_operand.vmem [shape: f32[2,1,32], index: 7, kind: input, shape index: {}]
  %s8 = inlined_call_operand.vmem [shape: f32[2,1,32], index: 8, kind: input, shape index: {}, may-alias: {8,14}]
  %s9 = inlined_call_operand.vmem [shape: f32[2,1,32], index: 9, kind: input, shape index: {}, may-alias: {9,15}]
  %s10 = inlined_call_operand.vmem [shape: bf16[2,32,64], index: 10, kind: input, shape index: {}]
  %s11 = inlined_call_operand.vmem [shape: f32[2,1,64], index: 11, kind: input, shape index: {}]
  %s12 = inlined_call_operand.vmem [shape: bf16[2,64,32], index: 12, kind: input, shape index: {}]
  %s13 = inlined_call_operand.vmem [shape: f32[2,1,32], index: 13, kind: input, shape index: {}]
  %s14 = inlined_call_operand.vmem [shape: f32[2,1,32], index: 14, kind: input, shape index: {}, may-alias: {8,14}]
  %s15 = inlined_call_operand.vmem [shape: f32[2,1,32], index: 15, kind: input, shape index: {}, may-alias: {9,15}]
  %s16 = inlined_call_operand.vmem [shape: bf16[32,32], index: 16, kind: input, shape index: {}]
  %s17 = inlined_call_operand.vmem [shape: f32[1,32], index: 17, kind: input, shape index: {}]
  %s18 = inlined_call_operand.vmem [shape: bf16[32,128], index: 18, kind: input, shape index: {}]
  %s19 = inlined_call_operand.vmem [shape: bf16[32,128], index: 19, kind: input, shape index: {}]
  %s20 = inlined_call_operand.vmem [shape: f32[1,128], index: 20, kind: input, shape index: {}]
  %s21 = inlined_call_operand.vmem [shape: f32[16,128], index: 21, kind: output, shape index: {}]
  %s22 = sld [smem:[#allocation0]]
  $region125: #{bert_joint_forward.1} parent=0
    _
  %s24 = ssub.s32 1, %s22
  %s25 = scalar_select 0, %s24, %s22
  loop: start=0, step=1, limit=4
  $region2: #{bert_joint_forward.1} parent=0 // loop_pre_header
    _
  $region3: #{bert_joint_forward.1} parent=0 // loop_header
    %s27 = sphi 0, %s31
    %p28 = scmp.ge.s32.totalorder %s27, 4
    %s35 = sphi 0, %s35
    %s37 = sphi 0, %s35
    %s38 = sphi 0, %s37
    %s52 = sphi 0, %s38
    %s56 = sphi 0, %s56
    %s58 = sphi 0, %s56
    %s59 = sphi 0, %s58
    %s73 = sphi 0, %s59
    %s77 = sphi 0, %s77
    %s79 = sphi 0, %s77
    %s80 = sphi 0, %s79
    %s94 = sphi 0, %s80
    %s98 = sphi 0, %s98
    %s100 = sphi 0, %s98
    %s101 = sphi 0, %s100
    %s115 = sphi 0, %s101
    %s121 = sphi 0, %s123
    %s124 = sphi 0, %s121
    %s125 = sphi 0, %s124
    %s141 = sphi 0, %s125
    %s147 = sphi 0, %s149
    %s150 = sphi 0, %s147
    %s151 = sphi 0, %s150
    %s167 = sphi 0, %s151
    %s173 = sphi 0, %s175
    %s176 = sphi 0, %s173
    %s177 = sphi 0, %s176
    %s193 = sphi 0, %s177
    %s199 = sphi 0, %s201
    %s202 = sphi 0, %s199
    %s203 = sphi 0, %s202
    %s219 = sphi 0, %s203
    %s225 = sphi 0, %s227
    %s228 = sphi 0, %s225
    %s229 = sphi 0, %s228
    %s245 = sphi 0, %s229
    %s251 = sphi 0, %s253
    %s254 = sphi 0, %s251
    %s255 = sphi 0, %s254
    %s271 = sphi 0, %s255
    %s277 = sphi 0, %s279
    %s280 = sphi 0, %s277
    %s281 = sphi 0, %s280
    %s297 = sphi 0, %s281
    %s303 = sphi 0, %s305
    %s306 = sphi 0, %s303
    %s307 = sphi 0, %s306
    %s323 = sphi 0, %s307
    %s329 = sphi 0, %s331
    %s332 = sphi 0, %s329
    %s333 = sphi 0, %s332
    %s349 = sphi 0, %s333
    %s355 = sphi 0, %s357
    %s358 = sphi 0, %s355
    %s359 = sphi 0, %s358
    %s375 = sphi 0, %s359
    %s381 = sphi 0, %s383
    %s384 = sphi 0, %s381
    %s385 = sphi 0, %s384
    %s401 = sphi 0, %s385
    %s407 = sphi 0, %s409
    %s410 = sphi 0, %s407
    %s411 = sphi 0, %s410
    %s427 = sphi 0, %s411
    %s431 = sphi 0, %s431
    %s433 = sphi 0, %s431
    %s434 = sphi 0, %s433
    %s448 = sphi 0, %s434
    %s452 = sphi 0, %s452
    %s454 = sphi 0, %s452
    %s455 = sphi 0, %s454
    %s469 = sphi 0, %s455
    %s473 = sphi 0, %s473
    %s475 = sphi 0, %s473
    %s476 = sphi 0, %s475
    %s490 = sphi 0, %s476
    %s494 = sphi 0, %s494
    %s496 = sphi 0, %s494
    %s497 = sphi 0, %s496
    %s511 = sphi 0, %s497
    %s515 = sphi 0, %s515
    %s517 = sphi 0, %s515
    %s518 = sphi 0, %s517
    %s532 = sphi 0, %s518
    %s536 = sphi 0, %s536
    %s538 = sphi 0, %s536
    %s539 = sphi 0, %s538
    %s553 = sphi 0, %s539
  $region4: #{bert_joint_forward.1} parent=0 // loop_header_branch
    %30 = sbr.rel (%p28) target = $region8
  $region5: #{bert_joint_forward.1} parent=0 // loop_body
    %s32 = ssub.s32 %s27, 1
    %s33 = ssub.s32 %s27, 2
    %s34 = sadd.s32 %s27, 1
    %s36 = sadd.s32 %s35, 1
    %p39 = scmp.eq.s32.totalorder %s27, 1
    %p40 = scmp.ne.s32.totalorder %s35, %s37
    %p41 = scmp.eq.s32.totalorder %s27, 0
    %p42 = por %p40, %p41
    %p43 = scmp.ne.s32.totalorder %s35, %s37
    %p44 = scmp.eq.s32.totalorder %s32, 1
    %p45 = por %p43, %p44
    %p46 = scmp.ne.s32.totalorder %s37, %s38
    %p47 = scmp.eq.s32.totalorder %s32, 0
    %p48 = por %p46, %p47
    %p49 = scmp.ne.s32.totalorder %s37, %s38
    %p50 = scmp.eq.s32.totalorder %s33, 1
    %p51 = por %p49, %p50
    %p53 = scmp.ne.s32.totalorder %s38, %s52
    %p54 = scmp.eq.s32.totalorder %s33, 0
    %p55 = por %p53, %p54
    %s57 = sadd.s32 %s56, 1
    %p60 = scmp.eq.s32.totalorder %s27, 1
    %p61 = scmp.ne.s32.totalorder %s56, %s58
    %p62 = scmp.eq.s32.totalorder %s27, 0
    %p63 = por %p61, %p62
    %p64 = scmp.ne.s32.totalorder %s56, %s58
    %p65 = scmp.eq.s32.totalorder %s32, 1
    %p66 = por %p64, %p65
    %p67 = scmp.ne.s32.totalorder %s58, %s59
    %p68 = scmp.eq.s32.totalorder %s32, 0
    %p69 = por %p67, %p68
    %p70 = scmp.ne.s32.totalorder %s58, %s59
    %p71 = scmp.eq.s32.totalorder %s33, 1
    %p72 = por %p70, %p71
    %p74 = scmp.ne.s32.totalorder %s59, %s73
    %p75 = scmp.eq.s32.totalorder %s33, 0
    %p76 = por %p74, %p75
    %s78 = sadd.s32 %s77, 1
    %p81 = scmp.eq.s32.totalorder %s27, 1
    %p82 = scmp.ne.s32.totalorder %s77, %s79
    %p83 = scmp.eq.s32.totalorder %s27, 0
    %p84 = por %p82, %p83
    %p85 = scmp.ne.s32.totalorder %s77, %s79
    %p86 = scmp.eq.s32.totalorder %s32, 1
    %p87 = por %p85, %p86
    %p88 = scmp.ne.s32.totalorder %s79, %s80
    %p89 = scmp.eq.s32.totalorder %s32, 0
    %p90 = por %p88, %p89
    %p91 = scmp.ne.s32.totalorder %s79, %s80
    %p92 = scmp.eq.s32.totalorder %s33, 1
    %p93 = por %p91, %p92
    %p95 = scmp.ne.s32.totalorder %s80, %s94
    %p96 = scmp.eq.s32.totalorder %s33, 0
    %p97 = por %p95, %p96
    %s99 = sadd.s32 %s98, 1
    %p102 = scmp.eq.s32.totalorder %s27, 1
    %p103 = scmp.ne.s32.totalorder %s98, %s100
    %p104 = scmp.eq.s32.totalorder %s27, 0
    %p105 = por %p103, %p104
    %p106 = scmp.ne.s32.totalorder %s98, %s100
    %p107 = scmp.eq.s32.totalorder %s32, 1
    %p108 = por %p106, %p107
    %p109 = scmp.ne.s32.totalorder %s100, %s101
    %p110 = scmp.eq.s32.totalorder %s32, 0
    %p111 = por %p109, %p110
    %p112 = scmp.ne.s32.totalorder %s100, %s101
    %p113 = scmp.eq.s32.totalorder %s33, 1
    %p114 = por %p112, %p113
    %p116 = scmp.ne.s32.totalorder %s101, %s115
    %p117 = scmp.eq.s32.totalorder %s33, 0
    %p118 = por %p116, %p117
    %s119 = ssub.s32 %s27, %s34
    %p120 = scmp.eq.s32.totalorder %s119, 0
    %s122 = sadd.s32 %s121, 1
    %s123 = scalar_select %p120, %s121, %s122
    %p126 = pneg %p120
    %p127 = scmp.eq.s32.totalorder %s27, 1
    %p128 = por %p126, %p127
    %p129 = scmp.ne.s32.totalorder %s121, %s124
    %p130 = scmp.eq.s32.totalorder %s27, 0
    %p131 = por %p129, %p130
    %p132 = scmp.ne.s32.totalorder %s121, %s124
    %p133 = scmp.eq.s32.totalorder %s32, 1
    %p134 = por %p132, %p133
    %p135 = scmp.ne.s32.totalorder %s124, %s125
    %p136 = scmp.eq.s32.totalorder %s32, 0
    %p137 = por %p135, %p136
    %p138 = scmp.ne.s32.totalorder %s124, %s125
    %p139 = scmp.eq.s32.totalorder %s33, 1
    %p140 = por %p138, %p139
    %p142 = scmp.ne.s32.totalorder %s125, %s141
    %p143 = scmp.eq.s32.totalorder %s33, 0
    %p144 = por %p142, %p143
    %s145 = ssub.s32 %s27, %s34
    %p146 = scmp.eq.s32.totalorder %s145, 0
    %s148 = sadd.s32 %s147, 1
    %s149 = scalar_select %p146, %s147, %s148
    %p152 = pneg %p146
    %p153 = scmp.eq.s32.totalorder %s27, 1
    %p154 = por %p152, %p153
    %p155 = scmp.ne.s32.totalorder %s147, %s150
    %p156 = scmp.eq.s32.totalorder %s27, 0
    %p157 = por %p155, %p156
    %p158 = scmp.ne.s32.totalorder %s147, %s150
    %p159 = scmp.eq.s32.totalorder %s32, 1
    %p160 = por %p158, %p159
    %p161 = scmp.ne.s32.totalorder %s150, %s151
    %p162 = scmp.eq.s32.totalorder %s32, 0
    %p163 = por %p161, %p162
    %p164 = scmp.ne.s32.totalorder %s150, %s151
    %p165 = scmp.eq.s32.totalorder %s33, 1
    %p166 = por %p164, %p165
    %p168 = scmp.ne.s32.totalorder %s151, %s167
    %p169 = scmp.eq.s32.totalorder %s33, 0
    %p170 = por %p168, %p169
    %s171 = ssub.s32 %s27, %s34
    %p172 = scmp.eq.s32.totalorder %s171, 0
    %s174 = sadd.s32 %s173, 1
    %s175 = scalar_select %p172, %s173, %s174
    %p178 = pneg %p172
    %p179 = scmp.eq.s32.totalorder %s27, 1
    %p180 = por %p178, %p179
    %p181 = scmp.ne.s32.totalorder %s173, %s176
    %p182 = scmp.eq.s32.totalorder %s27, 0
    %p183 = por %p181, %p182
    %p184 = scmp.ne.s32.totalorder %s173, %s176
    %p185 = scmp.eq.s32.totalorder %s32, 1
    %p186 = por %p184, %p185
    %p187 = scmp.ne.s32.totalorder %s176, %s177
    %p188 = scmp.eq.s32.totalorder %s32, 0
    %p189 = por %p187, %p188
    %p190 = scmp.ne.s32.totalorder %s176, %s177
    %p191 = scmp.eq.s32.totalorder %s33, 1
    %p192 = por %p190, %p191
    %p194 = scmp.ne.s32.totalorder %s177, %s193
    %p195 = scmp.eq.s32.totalorder %s33, 0
    %p196 = por %p194, %p195
    %s197 = ssub.s32 %s27, %s34
    %p198 = scmp.eq.s32.totalorder %s197, 0
    %s200 = sadd.s32 %s199, 1
    %s201 = scalar_select %p198, %s199, %s200
    %p204 = pneg %p198
    %p205 = scmp.eq.s32.totalorder %s27, 1
    %p206 = por %p204, %p205
    %p207 = scmp.ne.s32.totalorder %s199, %s202
    %p208 = scmp.eq.s32.totalorder %s27, 0
    %p209 = por %p207, %p208
    %p210 = scmp.ne.s32.totalorder %s199, %s202
    %p211 = scmp.eq.s32.totalorder %s32, 1
    %p212 = por %p210, %p211
    %p213 = scmp.ne.s32.totalorder %s202, %s203
    %p214 = scmp.eq.s32.totalorder %s32, 0
    %p215 = por %p213, %p214
    %p216 = scmp.ne.s32.totalorder %s202, %s203
    %p217 = scmp.eq.s32.totalorder %s33, 1
    %p218 = por %p216, %p217
    %p220 = scmp.ne.s32.totalorder %s203, %s219
    %p221 = scmp.eq.s32.totalorder %s33, 0
    %p222 = por %p220, %p221
    %s223 = ssub.s32 %s27, %s34
    %p224 = scmp.eq.s32.totalorder %s223, 0
    %s226 = sadd.s32 %s225, 1
    %s227 = scalar_select %p224, %s225, %s226
    %p230 = pneg %p224
    %p231 = scmp.eq.s32.totalorder %s27, 1
    %p232 = por %p230, %p231
    %p233 = scmp.ne.s32.totalorder %s225, %s228
    %p234 = scmp.eq.s32.totalorder %s27, 0
    %p235 = por %p233, %p234
    %p236 = scmp.ne.s32.totalorder %s225, %s228
    %p237 = scmp.eq.s32.totalorder %s32, 1
    %p238 = por %p236, %p237
    %p239 = scmp.ne.s32.totalorder %s228, %s229
    %p240 = scmp.eq.s32.totalorder %s32, 0
    %p241 = por %p239, %p240
    %p242 = scmp.ne.s32.totalorder %s228, %s229
    %p243 = scmp.eq.s32.totalorder %s33, 1
    %p244 = por %p242, %p243
    %p246 = scmp.ne.s32.totalorder %s229, %s245
    %p247 = scmp.eq.s32.totalorder %s33, 0
    %p248 = por %p246, %p247
    %s249 = ssub.s32 %s27, %s34
    %p250 = scmp.eq.s32.totalorder %s249, 0
    %s252 = sadd.s32 %s251, 1
    %s253 = scalar_select %p250, %s251, %s252
    %p256 = pneg %p250
    %p257 = scmp.eq.s32.totalorder %s27, 1
    %p258 = por %p256, %p257
    %p259 = scmp.ne.s32.totalorder %s251, %s254
    %p260 = scmp.eq.s32.totalorder %s27, 0
    %p261 = por %p259, %p260
    %p262 = scmp.ne.s32.totalorder %s251, %s254
    %p263 = scmp.eq.s32.totalorder %s32, 1
    %p264 = por %p262, %p263
    %p265 = scmp.ne.s32.totalorder %s254, %s255
    %p266 = scmp.eq.s32.totalorder %s32, 0
    %p267 = por %p265, %p266
    %p268 = scmp.ne.s32.totalorder %s254, %s255
    %p269 = scmp.eq.s32.totalorder %s33, 1
    %p270 = por %p268, %p269
    %p272 = scmp.ne.s32.totalorder %s255, %s271
    %p273 = scmp.eq.s32.totalorder %s33, 0
    %p274 = por %p272, %p273
    %s275 = ssub.s32 %s27, %s34
    %p276 = scmp.eq.s32.totalorder %s275, 0
    %s278 = sadd.s32 %s277, 1
    %s279 = scalar_select %p276, %s277, %s278
    %p282 = pneg %p276
    %p283 = scmp.eq.s32.totalorder %s27, 1
    %p284 = por %p282, %p283
    %p285 = scmp.ne.s32.totalorder %s277, %s280
    %p286 = scmp.eq.s32.totalorder %s27, 0
    %p287 = por %p285, %p286
    %p288 = scmp.ne.s32.totalorder %s277, %s280
    %p289 = scmp.eq.s32.totalorder %s32, 1
    %p290 = por %p288, %p289
    %p291 = scmp.ne.s32.totalorder %s280, %s281
    %p292 = scmp.eq.s32.totalorder %s32, 0
    %p293 = por %p291, %p292
    %p294 = scmp.ne.s32.totalorder %s280, %s281
    %p295 = scmp.eq.s32.totalorder %s33, 1
    %p296 = por %p294, %p295
    %p298 = scmp.ne.s32.totalorder %s281, %s297
    %p299 = scmp.eq.s32.totalorder %s33, 0
    %p300 = por %p298, %p299
    %s301 = ssub.s32 %s27, %s34
    %p302 = scmp.eq.s32.totalorder %s301, 0
    %s304 = sadd.s32 %s303, 1
    %s305 = scalar_select %p302, %s303, %s304
    %p308 = pneg %p302
    %p309 = scmp.eq.s32.totalorder %s27, 1
    %p310 = por %p308, %p309
    %p311 = scmp.ne.s32.totalorder %s303, %s306
    %p312 = scmp.eq.s32.totalorder %s27, 0
    %p313 = por %p311, %p312
    %p314 = scmp.ne.s32.totalorder %s303, %s306
    %p315 = scmp.eq.s32.totalorder %s32, 1
    %p316 = por %p314, %p315
    %p317 = scmp.ne.s32.totalorder %s306, %s307
    %p318 = scmp.eq.s32.totalorder %s32, 0
    %p319 = por %p317, %p318
    %p320 = scmp.ne.s32.totalorder %s306, %s307
    %p321 = scmp.eq.s32.totalorder %s33, 1
    %p322 = por %p320, %p321
    %p324 = scmp.ne.s32.totalorder %s307, %s323
    %p325 = scmp.eq.s32.totalorder %s33, 0
    %p326 = por %p324, %p325
    %s327 = ssub.s32 %s27, %s34
    %p328 = scmp.eq.s32.totalorder %s327, 0
    %s330 = sadd.s32 %s329, 1
    %s331 = scalar_select %p328, %s329, %s330
    %p334 = pneg %p328
    %p335 = scmp.eq.s32.totalorder %s27, 1
    %p336 = por %p334, %p335
    %p337 = scmp.ne.s32.totalorder %s329, %s332
    %p338 = scmp.eq.s32.totalorder %s27, 0
    %p339 = por %p337, %p338
    %p340 = scmp.ne.s32.totalorder %s329, %s332
    %p341 = scmp.eq.s32.totalorder %s32, 1
    %p342 = por %p340, %p341
    %p343 = scmp.ne.s32.totalorder %s332, %s333
    %p344 = scmp.eq.s32.totalorder %s32, 0
    %p345 = por %p343, %p344
    %p346 = scmp.ne.s32.totalorder %s332, %s333
    %p347 = scmp.eq.s32.totalorder %s33, 1
    %p348 = por %p346, %p347
    %p350 = scmp.ne.s32.totalorder %s333, %s349
    %p351 = scmp.eq.s32.totalorder %s33, 0
    %p352 = por %p350, %p351
    %s353 = ssub.s32 %s27, %s34
    %p354 = scmp.eq.s32.totalorder %s353, 0
    %s356 = sadd.s32 %s355, 1
    %s357 = scalar_select %p354, %s355, %s356
    %p360 = pneg %p354
    %p361 = scmp.eq.s32.totalorder %s27, 1
    %p362 = por %p360, %p361
    %p363 = scmp.ne.s32.totalorder %s355, %s358
    %p364 = scmp.eq.s32.totalorder %s27, 0
    %p365 = por %p363, %p364
    %p366 = scmp.ne.s32.totalorder %s355, %s358
    %p367 = scmp.eq.s32.totalorder %s32, 1
    %p368 = por %p366, %p367
    %p369 = scmp.ne.s32.totalorder %s358, %s359
    %p370 = scmp.eq.s32.totalorder %s32, 0
    %p371 = por %p369, %p370
    %p372 = scmp.ne.s32.totalorder %s358, %s359
    %p373 = scmp.eq.s32.totalorder %s33, 1
    %p374 = por %p372, %p373
    %p376 = scmp.ne.s32.totalorder %s359, %s375
    %p377 = scmp.eq.s32.totalorder %s33, 0
    %p378 = por %p376, %p377
    %s379 = ssub.s32 %s27, %s34
    %p380 = scmp.eq.s32.totalorder %s379, 0
    %s382 = sadd.s32 %s381, 1
    %s383 = scalar_select %p380, %s381, %s382
    %p386 = pneg %p380
    %p387 = scmp.eq.s32.totalorder %s27, 1
    %p388 = por %p386, %p387
    %p389 = scmp.ne.s32.totalorder %s381, %s384
    %p390 = scmp.eq.s32.totalorder %s27, 0
    %p391 = por %p389, %p390
    %p392 = scmp.ne.s32.totalorder %s381, %s384
    %p393 = scmp.eq.s32.totalorder %s32, 1
    %p394 = por %p392, %p393
    %p395 = scmp.ne.s32.totalorder %s384, %s385
    %p396 = scmp.eq.s32.totalorder %s32, 0
    %p397 = por %p395, %p396
    %p398 = scmp.ne.s32.totalorder %s384, %s385
    %p399 = scmp.eq.s32.totalorder %s33, 1
    %p400 = por %p398, %p399
    %p402 = scmp.ne.s32.totalorder %s385, %s401
    %p403 = scmp.eq.s32.totalorder %s33, 0
    %p404 = por %p402, %p403
    %s405 = ssub.s32 %s27, %s34
    %p406 = scmp.eq.s32.totalorder %s405, 0
    %s408 = sadd.s32 %s407, 1
    %s409 = scalar_select %p406, %s407, %s408
    %p412 = pneg %p406
    %p413 = scmp.eq.s32.totalorder %s27, 1
    %p414 = por %p412, %p413
    %p415 = scmp.ne.s32.totalorder %s407, %s410
    %p416 = scmp.eq.s32.totalorder %s27, 0
    %p417 = por %p415, %p416
    %p418 = scmp.ne.s32.totalorder %s407, %s410
    %p419 = scmp.eq.s32.totalorder %s32, 1
    %p420 = por %p418, %p419
    %p421 = scmp.ne.s32.totalorder %s410, %s411
    %p422 = scmp.eq.s32.totalorder %s32, 0
    %p423 = por %p421, %p422
    %p424 = scmp.ne.s32.totalorder %s410, %s411
    %p425 = scmp.eq.s32.totalorder %s33, 1
    %p426 = por %p424, %p425
    %p428 = scmp.ne.s32.totalorder %s411, %s427
    %p429 = scmp.eq.s32.totalorder %s33, 0
    %p430 = por %p428, %p429
    %s432 = sadd.s32 %s431, 1
    %p435 = scmp.eq.s32.totalorder %s27, 1
    %p436 = scmp.ne.s32.totalorder %s431, %s433
    %p437 = scmp.eq.s32.totalorder %s27, 0
    %p438 = por %p436, %p437
    %p439 = scmp.ne.s32.totalorder %s431, %s433
    %p440 = scmp.eq.s32.totalorder %s32, 1
    %p441 = por %p439, %p440
    %p442 = scmp.ne.s32.totalorder %s433, %s434
    %p443 = scmp.eq.s32.totalorder %s32, 0
    %p444 = por %p442, %p443
    %p445 = scmp.ne.s32.totalorder %s433, %s434
    %p446 = scmp.eq.s32.totalorder %s33, 1
    %p447 = por %p445, %p446
    %p449 = scmp.ne.s32.totalorder %s434, %s448
    %p450 = scmp.eq.s32.totalorder %s33, 0
    %p451 = por %p449, %p450
    %s453 = sadd.s32 %s452, 1
    %p456 = scmp.eq.s32.totalorder %s27, 1
    %p457 = scmp.ne.s32.totalorder %s452, %s454
    %p458 = scmp.eq.s32.totalorder %s27, 0
    %p459 = por %p457, %p458
    %p460 = scmp.ne.s32.totalorder %s452, %s454
    %p461 = scmp.eq.s32.totalorder %s32, 1
    %p462 = por %p460, %p461
    %p463 = scmp.ne.s32.totalorder %s454, %s455
    %p464 = scmp.eq.s32.totalorder %s32, 0
    %p465 = por %p463, %p464
    %p466 = scmp.ne.s32.totalorder %s454, %s455
    %p467 = scmp.eq.s32.totalorder %s33, 1
    %p468 = por %p466, %p467
    %p470 = scmp.ne.s32.totalorder %s455, %s469
    %p471 = scmp.eq.s32.totalorder %s33, 0
    %p472 = por %p470, %p471
    %s474 = sadd.s32 %s473, 1
    %p477 = scmp.eq.s32.totalorder %s27, 1
    %p478 = scmp.ne.s32.totalorder %s473, %s475
    %p479 = scmp.eq.s32.totalorder %s27, 0
    %p480 = por %p478, %p479
    %p481 = scmp.ne.s32.totalorder %s473, %s475
    %p482 = scmp.eq.s32.totalorder %s32, 1
    %p483 = por %p481, %p482
    %p484 = scmp.ne.s32.totalorder %s475, %s476
    %p485 = scmp.eq.s32.totalorder %s32, 0
    %p486 = por %p484, %p485
    %p487 = scmp.ne.s32.totalorder %s475, %s476
    %p488 = scmp.eq.s32.totalorder %s33, 1
    %p489 = por %p487, %p488
    %p491 = scmp.ne.s32.totalorder %s476, %s490
    %p492 = scmp.eq.s32.totalorder %s33, 0
    %p493 = por %p491, %p492
    %s495 = sadd.s32 %s494, 1
    %p498 = scmp.eq.s32.totalorder %s27, 1
    %p499 = scmp.ne.s32.totalorder %s494, %s496
    %p500 = scmp.eq.s32.totalorder %s27, 0
    %p501 = por %p499, %p500
    %p502 = scmp.ne.s32.totalorder %s494, %s496
    %p503 = scmp.eq.s32.totalorder %s32, 1
    %p504 = por %p502, %p503
    %p505 = scmp.ne.s32.totalorder %s496, %s497
    %p506 = scmp.eq.s32.totalorder %s32, 0
    %p507 = por %p505, %p506
    %p508 = scmp.ne.s32.totalorder %s496, %s497
    %p509 = scmp.eq.s32.totalorder %s33, 1
    %p510 = por %p508, %p509
    %p512 = scmp.ne.s32.totalorder %s497, %s511
    %p513 = scmp.eq.s32.totalorder %s33, 0
    %p514 = por %p512, %p513
    %s516 = sadd.s32 %s515, 1
    %p519 = scmp.eq.s32.totalorder %s27, 1
    %p520 = scmp.ne.s32.totalorder %s515, %s517
    %p521 = scmp.eq.s32.totalorder %s27, 0
    %p522 = por %p520, %p521
    %p523 = scmp.ne.s32.totalorder %s515, %s517
    %p524 = scmp.eq.s32.totalorder %s32, 1
    %p525 = por %p523, %p524
    %p526 = scmp.ne.s32.totalorder %s517, %s518
    %p527 = scmp.eq.s32.totalorder %s32, 0
    %p528 = por %p526, %p527
    %p529 = scmp.ne.s32.totalorder %s517, %s518
    %p530 = scmp.eq.s32.totalorder %s33, 1
    %p531 = por %p529, %p530
    %p533 = scmp.ne.s32.totalorder %s518, %s532
    %p534 = scmp.eq.s32.totalorder %s33, 0
    %p535 = por %p533, %p534
    %s537 = sadd.s32 %s536, 1
    %p540 = scmp.eq.s32.totalorder %s27, 1
    %p541 = scmp.ne.s32.totalorder %s536, %s538
    %p542 = scmp.eq.s32.totalorder %s27, 0
    %p543 = por %p541, %p542
    %p544 = scmp.ne.s32.totalorder %s536, %s538
    %p545 = scmp.eq.s32.totalorder %s32, 1
    %p546 = por %p544, %p545
    %p547 = scmp.ne.s32.totalorder %s538, %s539
    %p548 = scmp.eq.s32.totalorder %s32, 0
    %p549 = por %p547, %p548
    %p550 = scmp.ne.s32.totalorder %s538, %s539
    %p551 = scmp.eq.s32.totalorder %s33, 1
    %p552 = por %p550, %p551
    %p554 = scmp.ne.s32.totalorder %s539, %s553
    %p555 = scmp.eq.s32.totalorder %s33, 0
    %p556 = por %p554, %p555
    %p557 = scmp.le.s32.totalorder 1, %s27
    %p558 = scmp.lt.s32.totalorder %s27, 3
    %p559 = pnand %p557, %p558
    %p560 = pneg %p559
    // Predicated region
    $region9: #{bert_joint_forward.1} parent=5 // pred_check
      _
    $region10: #{bert_joint_forward.1} parent=5 // pred_check_branch
      %562 = sbr.rel (%p559) target = $region12
    $region11: #{bert_joint_forward.1} parent=5 // pred_region
      %s563 = ssub.s32 %s27, 1
      // Predicated region
      $region13: #{bert_joint_forward.1} parent=11 // pred_check
        %p564 = pneg %p48
      $region14: #{bert_joint_forward.1} parent=11 // pred_check_branch
        %566 = sbr.rel (%p564) target = $region16
      $region15: #{bert_joint_forward.1} parent=11 // pred_region
        _
      $region16: #{bert_joint_forward.1} parent=11 // pred_fallthru
        _
      // Predicated region
      $region17: #{bert_joint_forward.1} parent=11 // pred_check
        %p567 = pneg %p69
      $region18: #{bert_joint_forward.1} parent=11 // pred_check_branch
        %569 = sbr.rel (%p567) target = $region20
      $region19: #{bert_joint_forward.1} parent=11 // pred_region
        _
      $region20: #{bert_joint_forward.1} parent=11 // pred_fallthru
        _
      // Predicated region
      $region21: #{bert_joint_forward.1} parent=11 // pred_check
        %p570 = pneg %p90
      $region22: #{bert_joint_forward.1} parent=11 // pred_check_branch
        %572 = sbr.rel (%p570) target = $region24
      $region23: #{bert_joint_forward.1} parent=11 // pred_region
        _
      $region24: #{bert_joint_forward.1} parent=11 // pred_fallthru
        _
      // Predicated region
      $region25: #{bert_joint_forward.1} parent=11 // pred_check
        %p573 = pneg %p111
      $region26: #{bert_joint_forward.1} parent=11 // pred_check_branch
        %575 = sbr.rel (%p573) target = $region28
      $region27: #{bert_joint_forward.1} parent=11 // pred_region
        _
      $region28: #{bert_joint_forward.1} parent=11 // pred_fallthru
        _
      // Predicated region
      $region29: #{bert_joint_forward.1} parent=11 // pred_check
        %p576 = pneg %p444
      $region30: #{bert_joint_forward.1} parent=11 // pred_check_branch
        %578 = sbr.rel (%p576) target = $region32
      $region31: #{bert_joint_forward.1} parent=11 // pred_region
        _
      $region32: #{bert_joint_forward.1} parent=11 // pred_fallthru
        _
      // Predicated region
      $region33: #{bert_joint_forward.1} parent=11 // pred_check
        %p579 = pneg %p465
      $region34: #{bert_joint_forward.1} parent=11 // pred_check_branch
        %581 = sbr.rel (%p579) target = $region36
      $region35: #{bert_joint_forward.1} parent=11 // pred_region
        _
      $region36: #{bert_joint_forward.1} parent=11 // pred_fallthru
        _
      // Predicated region
      $region37: #{bert_joint_forward.1} parent=11 // pred_check
        %p582 = pneg %p486
      $region38: #{bert_joint_forward.1} parent=11 // pred_check_branch
        %584 = sbr.rel (%p582) target = $region40
      $region39: #{bert_joint_forward.1} parent=11 // pred_region
        _
      $region40: #{bert_joint_forward.1} parent=11 // pred_fallthru
        _
      // Predicated region
      $region41: #{bert_joint_forward.1} parent=11 // pred_check
        %p585 = pneg %p507
      $region42: #{bert_joint_forward.1} parent=11 // pred_check_branch
        %587 = sbr.rel (%p585) target = $region44
      $region43: #{bert_joint_forward.1} parent=11 // pred_region
        _
      $region44: #{bert_joint_forward.1} parent=11 // pred_fallthru
        _
      // Predicated region
      $region45: #{bert_joint_forward.1} parent=11 // pred_check
        %p588 = pneg %p528
      $region46: #{bert_joint_forward.1} parent=11 // pred_check_branch
        %590 = sbr.rel (%p588) target = $region48
      $region47: #{bert_joint_forward.1} parent=11 // pred_region
        _
      $region48: #{bert_joint_forward.1} parent=11 // pred_fallthru
        _
    $region12: #{bert_joint_forward.1} parent=5 // pred_fallthru
      _
    %p591 = scmp.lt.s32.totalorder %s27, 2
    // Predicated region
    $region49: #{bert_joint_forward.1} parent=5 // pred_check
      %p592 = pneg %p591
    $region50: #{bert_joint_forward.1} parent=5 // pred_check_branch
      %594 = sbr.rel (%p592) target = $region52
    $region51: #{bert_joint_forward.1} parent=5 // pred_region
      // Predicated region
      $region53: #{bert_joint_forward.1} parent=51 // pred_check
        %p595 = pneg %p131
      $region54: #{bert_joint_forward.1} parent=51 // pred_check_branch
        %597 = sbr.rel (%p595) target = $region56
      $region55: #{bert_joint_forward.1} parent=51 // pred_region
        %p598 = scmp.lt.s32.totalorder %s27, 1
        %s599 = scalar_select %p598, %s27, 1
        %s600 = smul.addr %s599, 4
        %s601 = smul.addr %s600, 4
        %s602 = scalar_lea.vmem %s4, %s601
      $region56: #{bert_joint_forward.1} parent=51 // pred_fallthru
        _
      // Predicated region
      $region57: #{bert_joint_forward.1} parent=51 // pred_check
        %p603 = pneg %p157
      $region58: #{bert_joint_forward.1} parent=51 // pred_check_branch
        %605 = sbr.rel (%p603) target = $region60
      $region59: #{bert_joint_forward.1} parent=51 // pred_region
        %p606 = scmp.lt.s32.totalorder %s27, 1
        %s607 = scalar_select %p606, %s27, 1
        %s608 = scalar_lea.vmem %s5, %s607
      $region60: #{bert_joint_forward.1} parent=51 // pred_fallthru
        _
      // Predicated region
      $region61: #{bert_joint_forward.1} parent=51 // pred_check
        %p609 = pneg %p183
      $region62: #{bert_joint_forward.1} parent=51 // pred_check_branch
        %611 = sbr.rel (%p609) target = $region64
      $region63: #{bert_joint_forward.1} parent=51 // pred_region
        %p612 = scmp.lt.s32.totalorder %s27, 1
        %s613 = scalar_select %p612, %s27, 1
        %s614 = smul.addr %s613, 4
        %s615 = smul.addr %s614, 4
        %s616 = scalar_lea.vmem %s6, %s615
      $region64: #{bert_joint_forward.1} parent=51 // pred_fallthru
        _
      // Predicated region
      $region65: #{bert_joint_forward.1} parent=51 // pred_check
        %p617 = pneg %p209
      $region66: #{bert_joint_forward.1} parent=51 // pred_check_branch
        %619 = sbr.rel (%p617) target = $region68
      $region67: #{bert_joint_forward.1} parent=51 // pred_region
        %p620 = scmp.lt.s32.totalorder %s27, 1
        %s621 = scalar_select %p620, %s27, 1
        %s622 = scalar_lea.vmem %s7, %s621
      $region68: #{bert_joint_forward.1} parent=51 // pred_fallthru
        _
      // Predicated region
      $region69: #{bert_joint_forward.1} parent=51 // pred_check
        %p623 = pneg %p235
      $region70: #{bert_joint_forward.1} parent=51 // pred_check_branch
        %625 = sbr.rel (%p623) target = $region72
      $region71: #{bert_joint_forward.1} parent=51 // pred_region
        %p626 = scmp.lt.s32.totalorder %s27, 1
        %s627 = scalar_select %p626, %s27, 1
        %s628 = scalar_lea.vmem %s8, %s627
      $region72: #{bert_joint_forward.1} parent=51 // pred_fallthru
        _
      // Predicated region
      $region73: #{bert_joint_forward.1} parent=51 // pred_check
        %p629 = pneg %p261
      $region74: #{bert_joint_forward.1} parent=51 // pred_check_branch
        %631 = sbr.rel (%p629) target = $region76
      $region75: #{bert_joint_forward.1} parent=51 // pred_region
        %p632 = scmp.lt.s32.totalorder %s27, 1
        %s633 = scalar_select %p632, %s27, 1
        %s634 = scalar_lea.vmem %s9, %s633
      $region76: #{bert_joint_forward.1} parent=51 // pred_fallthru
        _
      // Predicated region
      $region77: #{bert_joint_forward.1} parent=51 // pred_check
        %p635 = pneg %p287
      $region78: #{bert_joint_forward.1} parent=51 // pred_check_branch
        %637 = sbr.rel (%p635) target = $region80
      $region79: #{bert_joint_forward.1} parent=51 // pred_region
        %p638 = scmp.lt.s32.totalorder %s27, 1
        %s639 = scalar_select %p638, %s27, 1
        %s640 = smul.addr %s639, 4
        %s641 = smul.addr %s640, 4
        %s642 = scalar_lea.vmem %s10, %s641
      $region80: #{bert_joint_forward.1} parent=51 // pred_fallthru
        _
      // Predicated region
      $region81: #{bert_joint_forward.1} parent=51 // pred_check
        %p643 = pneg %p313
      $region82: #{bert_joint_forward.1} parent=51 // pred_check_branch
        %645 = sbr.rel (%p643) target = $region84
      $region83: #{bert_joint_forward.1} parent=51 // pred_region
        %p646 = scmp.lt.s32.totalorder %s27, 1
        %s647 = scalar_select %p646, %s27, 1
        %s648 = scalar_lea.vmem %s11, %s647
      $region84: #{bert_joint_forward.1} parent=51 // pred_fallthru
        _
      // Predicated region
      $region85: #{bert_joint_forward.1} parent=51 // pred_check
        %p649 = pneg %p339
      $region86: #{bert_joint_forward.1} parent=51 // pred_check_branch
        %651 = sbr.rel (%p649) target = $region88
      $region87: #{bert_joint_forward.1} parent=51 // pred_region
        %p652 = scmp.lt.s32.totalorder %s27, 1
        %s653 = scalar_select %p652, %s27, 1
        %s654 = smul.addr %s653, 8
        %s655 = smul.addr %s654, 4
        %s656 = scalar_lea.vmem %s12, %s655
      $region88: #{bert_joint_forward.1} parent=51 // pred_fallthru
        _
      // Predicated region
      $region89: #{bert_joint_forward.1} parent=51 // pred_check
        %p657 = pneg %p365
      $region90: #{bert_joint_forward.1} parent=51 // pred_check_branch
        %659 = sbr.rel (%p657) target = $region92
      $region91: #{bert_joint_forward.1} parent=51 // pred_region
        %p660 = scmp.lt.s32.totalorder %s27, 1
        %s661 = scalar_select %p660, %s27, 1
        %s662 = scalar_lea.vmem %s13, %s661
      $region92: #{bert_joint_forward.1} parent=51 // pred_fallthru
        _
      // Predicated region
      $region93: #{bert_joint_forward.1} parent=51 // pred_check
        %p663 = pneg %p391
      $region94: #{bert_joint_forward.1} parent=51 // pred_check_branch
        %665 = sbr.rel (%p663) target = $region96
      $region95: #{bert_joint_forward.1} parent=51 // pred_region
        %p666 = scmp.lt.s32.totalorder %s27, 1
        %s667 = scalar_select %p666, %s27, 1
        %s668 = scalar_lea.vmem %s14, %s667
      $region96: #{bert_joint_forward.1} parent=51 // pred_fallthru
        _
      // Predicated region
      $region97: #{bert_joint_forward.1} parent=51 // pred_check
        %p669 = pneg %p417
      $region98: #{bert_joint_forward.1} parent=51 // pred_check_branch
        %671 = sbr.rel (%p669) target = $region100
      $region99: #{bert_joint_forward.1} parent=51 // pred_region
        %p672 = scmp.lt.s32.totalorder %s27, 1
        %s673 = scalar_select %p672, %s27, 1
        %s674 = scalar_lea.vmem %s15, %s673
      $region100: #{bert_joint_forward.1} parent=51 // pred_fallthru
        _
    $region52: #{bert_joint_forward.1} parent=5 // pred_fallthru
      _
    %p675 = scmp.le.s32.totalorder 1, %s27
    %p676 = scmp.lt.s32.totalorder %s27, 3
    %p677 = pnand %p675, %p676
    %p678 = pneg %p677
    // Predicated region
    $region101: #{bert_joint_forward.1} parent=5 // pred_check
      _
    $region102: #{bert_joint_forward.1} parent=5 // pred_check_branch
      %680 = sbr.rel (%p677) target = $region104
    $region103: #{bert_joint_forward.1} parent=5 // pred_region
      %s681 = ssub.s32 %s27, 1
      %p682 = pneg %p48
      %p683 = pneg %p45
      %p684 = pneg %p69
      %p685 = pneg %p66
      %p686 = pneg %p90
      %p687 = pneg %p87
      %p688 = pneg %p111
      %p689 = pneg %p108
      %p690 = scmp.lt.s32.totalorder %s32, 1
      %s691 = scalar_select %p690, %s32, 1
      %s692 = smul.addr %s691, 4
      %s693 = smul.addr %s692, 4
      %s694 = scalar_lea.vmem %s4, %s693
      %p695 = pneg %p137
      %p696 = pneg %p134
      %p697 = scmp.lt.s32.totalorder %s32, 1
      %s698 = scalar_select %p697, %s32, 1
      %s699 = scalar_lea.vmem %s5, %s698
      %p700 = pneg %p163
      %p701 = pneg %p160
      %p702 = scmp.lt.s32.totalorder %s32, 1
      %s703 = scalar_select %p702, %s32, 1
      %s704 = smul.addr %s703, 4
      %s705 = smul.addr %s704, 4
      %s706 = scalar_lea.vmem %s6, %s705
      %p707 = pneg %p189
      %p708 = pneg %p186
      %p709 = scmp.lt.s32.totalorder %s32, 1
      %s710 = scalar_select %p709, %s32, 1
      %s711 = scalar_lea.vmem %s7, %s710
      %p712 = pneg %p215
      %p713 = pneg %p212
      %p714 = scmp.lt.s32.totalorder %s32, 1
      %s715 = scalar_select %p714, %s32, 1
      %s716 = scalar_lea.vmem %s8, %s715
      %p717 = pneg %p241
      %p718 = pneg %p238
      %p719 = scmp.lt.s32.totalorder %s32, 1
      %s720 = scalar_select %p719, %s32, 1
      %s721 = scalar_lea.vmem %s9, %s720
      %p722 = pneg %p267
      %p723 = pneg %p264
      %p724 = scmp.lt.s32.totalorder %s32, 1
      %s725 = scalar_select %p724, %s32, 1
      %s726 = smul.addr %s725, 4
      %s727 = smul.addr %s726, 4
      %s728 = scalar_lea.vmem %s10, %s727
      %p729 = pneg %p293
      %p730 = pneg %p290
      %p731 = scmp.lt.s32.totalorder %s32, 1
      %s732 = scalar_select %p731, %s32, 1
      %s733 = scalar_lea.vmem %s11, %s732
      %p734 = pneg %p319
      %p735 = pneg %p316
      %p736 = scmp.lt.s32.totalorder %s32, 1
      %s737 = scalar_select %p736, %s32, 1
      %s738 = smul.addr %s737, 8
      %s739 = smul.addr %s738, 4
      %s740 = scalar_lea.vmem %s12, %s739
      %p741 = pneg %p345
      %p742 = pneg %p342
      %p743 = scmp.lt.s32.totalorder %s32, 1
      %s744 = scalar_select %p743, %s32, 1
      %s745 = scalar_lea.vmem %s13, %s744
      %p746 = pneg %p371
      %p747 = pneg %p368
      %p748 = scmp.lt.s32.totalorder %s32, 1
      %s749 = scalar_select %p748, %s32, 1
      %s750 = scalar_lea.vmem %s14, %s749
      %p751 = pneg %p397
      %p752 = pneg %p394
      %p753 = scmp.lt.s32.totalorder %s32, 1
      %s754 = scalar_select %p753, %s32, 1
      %s755 = scalar_lea.vmem %s15, %s754
      %p756 = pneg %p423
      %p757 = pneg %p420
      %p758 = pneg %p444
      %p759 = pneg %p441
      %p760 = pneg %p465
      %p761 = pneg %p462
      %p762 = pneg %p486
      %p763 = pneg %p483
      %p764 = pneg %p507
      %p765 = pneg %p504
      %p766 = pneg %p528
      %p767 = pneg %p525
      %p768 = pneg %p549
      %p769 = pneg %p546
      %p770 = scmp.lt.s32.totalorder %s32, 1
      %s771 = scalar_select %p770, %s32, 1
      %s772 = smul.addr %s771, 4
      %s773 = smul.addr %s772, 4
      %s774 = scalar_lea.vmem %s4, %s773
      %p775 = scmp.lt.s32.totalorder %s32, 1
      %s776 = scalar_select %p775, %s32, 1
      %s777 = scalar_lea.vmem %s5, %s776
      %p778 = scmp.lt.s32.totalorder %s32, 1
      %s779 = scalar_select %p778, %s32, 1
      %s780 = smul.addr %s779, 4
      %s781 = smul.addr %s780, 4
      %s782 = scalar_lea.vmem %s6, %s781
      %p783 = scmp.lt.s32.totalorder %s32, 1
      %s784 = scalar_select %p783, %s32, 1
      %s785 = scalar_lea.vmem %s7, %s784
      %p786 = scmp.lt.s32.totalorder %s32, 1
      %s787 = scalar_select %p786, %s32, 1
      %s788 = scalar_lea.vmem %s8, %s787
      %p789 = scmp.lt.s32.totalorder %s32, 1
      %s790 = scalar_select %p789, %s32, 1
      %s791 = scalar_lea.vmem %s9, %s790
      %p792 = scmp.lt.s32.totalorder %s32, 1
      %s793 = scalar_select %p792, %s32, 1
      %s794 = smul.addr %s793, 4
      %s795 = smul.addr %s794, 4
      %s796 = scalar_lea.vmem %s10, %s795
      %p797 = scmp.lt.s32.totalorder %s32, 1
      %s798 = scalar_select %p797, %s32, 1
      %s799 = scalar_lea.vmem %s11, %s798
      %p800 = scmp.lt.s32.totalorder %s32, 1
      %s801 = scalar_select %p800, %s32, 1
      %s802 = smul.addr %s801, 8
      %s803 = smul.addr %s802, 4
      %s804 = scalar_lea.vmem %s12, %s803
      %p805 = scmp.lt.s32.totalorder %s32, 1
      %s806 = scalar_select %p805, %s32, 1
      %s807 = scalar_lea.vmem %s13, %s806
      %p808 = scmp.lt.s32.totalorder %s32, 1
      %s809 = scalar_select %p808, %s32, 1
      %s810 = scalar_lea.vmem %s14, %s809
      %p811 = scmp.lt.s32.totalorder %s32, 1
      %s812 = scalar_select %p811, %s32, 1
      %s813 = scalar_lea.vmem %s15, %s812
      %p815 = scmp.eq.s32.totalorder %s32, 0
      // Predicated region
      $region105: #{bert_joint_forward.1} parent=103 // pred_check
        %p816 = pneg %p815
      $region106: #{bert_joint_forward.1} parent=103 // pred_check_branch
        %818 = sbr.rel (%p816) target = $region108
      $region107: #{bert_joint_forward.1} parent=103 // pred_region
        %v819 = vld [vmem:[%s0] sm:$0xff]
        %v820 = vld [vmem:[%s0 + $0x8] sm:$0xff]
        %v821 = vld [vmem:[%s2] sm:$0x1]
        %v822 = vld [vmem:[%s3] sm:$0x1]
        %vm823 = vcmask 261120
        %v824 = vsel %vm823, %v819, 0.0
        %825 = vadd.xlane.f32.xlu0 %v824
        %v826 = vpop.xlane.xlu0 %825
        %v827 = vsel %vm823, %v820, 0.0
        %828 = vadd.xlane.f32.xlu0 %v827
        %v829 = vpop.xlane.xlu0 %828
        %v830 = vrcp.pop 32.0
        %v831 = vmul.f32 %v826, %v830
        %v832 = vmul.f32 %v829, %v830
        %v833 = vsub.f32 %v819, %v831
        %v834 = vsub.f32 %v820, %v832
        %v835 = vmul.f32 %v833, %v833
        %v836 = vmul.f32 %v834, %v834
        %v837 = vsel %vm823, %v835, 0.0
        %838 = vadd.xlane.f32.xlu0 %v837
        %v839 = vpop.xlane.xlu0 %838
        %v840 = vsel %vm823, %v836, 0.0
        %841 = vadd.xlane.f32.xlu0 %v840
        %v842 = vpop.xlane.xlu0 %841
        %v843 = vmul.f32 %v839, %v830
        %v844 = vmul.f32 %v842, %v830
        %v845 = vadd.f32 %v843, 1e-12
        %v846 = vadd.f32 %v844, 1e-12
        %v847 = vrsqrt.pop %v845
        %v848 = vrsqrt.pop %v846
        %v849 = vmul.f32 %v833, %v847
        %v850 = vmul.f32 %v834, %v848
        %v852 = vlaneseq
        %v853 = vshrl.u32 %v852, 7
        %v854 = vsub.s32 0, %v853
        %v855 = vrot.slane %v821, %v854
        %v857 = vmul.f32 %v849, %v855
        %v858 = vmul.f32 %v850, %v855
        %v860 = vlaneseq
        %v861 = vshrl.u32 %v860, 7
        %v862 = vsub.s32 0, %v861
        %v863 = vrot.slane %v822, %v862
        %v865 = vadd.f32 %v857, %v863
        %v866 = vadd.f32 %v858, %v863
        %867 = vst.msk [vmem:[#allocation2] sm:$0xff] %vm823, %v865
        %868 = vst.msk [vmem:[#allocation2 + $0x8] sm:$0xff] %vm823, %v866
      $region108: #{bert_joint_forward.1} parent=103 // pred_fallthru
        _
      %v869 = vld [vmem:[#allocation2] sm:$0xff]
      %v870 = vld [vmem:[#allocation2 + $0x8] sm:$0xff]
      %v871 = vpack.c.bf16 %v870, %v869
      %v872 = vld [vmem:[%s774] sm:$0xf]
      %v873 = vld [vmem:[%s774 + $0x4] sm:$0xf]
      %v874 = vld [vmem:[%s774 + $0x8] sm:$0xf]
      %v875 = vld [vmem:[%s774 + $0xc] sm:$0xf]
      %v876 = vld [vmem:[%s777] sm:$0x1]
      %v878 = vlaneseq
      %v879 = vshrl.u32 %v878, 7
      %v880 = vsub.s32 0, %v879
      %v881 = vrot.slane %v876, %v880
      %v887 = vunpack.c.l.b16 %v872
      %v888 = vunpack.c.l.b16 %v873
      %v889 = vunpack.c.l.b16 %v874
      %v890 = vunpack.c.l.b16 %v875
      %v891 = vpack.c.b16 %v888, %v887
      %v892 = vpack.c.b16 %v890, %v889
      %vm895 = vcmask 261120
      %v897 = vsel %vm895, %v871, 0
      %899 = vmatprep.subr.bf16.mxu0 0
      %900 = vmatpush1.bf16.msra.mxu0 %v891
      %901 = vmatprep.subr.bf16.mxu0 0
      %902 = vmatpush1.bf16.msra.mxu0 %v892
      %903 = vmatprep.subr.bf16.mxu0 0
      %904 = vmatpush1.bf16.msra.mxu0 0
      %905 = vmatprep.subr.bf16.mxu0 0
      %906 = vmatpush1.bf16.msra.mxu0 0
      %907 = vmatprep.subr.bf16.mxu0 0
      %908 = vmatpush1.bf16.msra.mxu0 0
      %909 = vmatprep.subr.bf16.mxu0 0
      %910 = vmatpush1.bf16.msra.mxu0 0
      %911 = vmatprep.subr.bf16.mxu0 0
      %912 = vmatpush1.bf16.msra.mxu0 0
      %913 = vmatprep.subr.bf16.mxu0 0
      %914 = vmatpush1.bf16.msra.mxu0 0
      %915 = vmatprep.subr.bf16.mxu0 0
      %916 = vmatpush1.bf16.msra.mxu0 0
      %917 = vmatprep.subr.bf16.mxu0 0
      %918 = vmatpush1.bf16.msra.mxu0 0
      %919 = vmatprep.subr.bf16.mxu0 0
      %920 = vmatpush1.bf16.msra.mxu0 0
      %921 = vmatprep.subr.bf16.mxu0 0
      %922 = vmatpush1.bf16.msra.mxu0 0
      %923 = vmatprep.subr.bf16.mxu0 0
      %924 = vmatpush1.bf16.msra.mxu0 0
      %925 = vmatprep.subr.bf16.mxu0 0
      %926 = vmatpush1.bf16.msra.mxu0 0
      %927 = vmatprep.subr.bf16.mxu0 0
      %928 = vmatpush1.bf16.msra.mxu0 0
      %929 = vmatprep.subr.bf16.mxu0 0
      %930 = vmatpush1.bf16.msra.mxu0 0
      %931 = vmatprep.mubr.bf16.mxu0 0
      %932 = vmatmul.mubr.bf16.gmra.mrb[0].mxu0 %v897
      %v933 = vpop.f32.mrb[0].mxu0
      %v934 = vadd.f32 %v881, %v933
      %v935 = vpop.f32.mrb[0].mxu0
      %v936 = vpop.f32.mrb[0].mxu0
      %v937 = vadd.f32 %v881, %v936
      %v938 = vpop.f32.mrb[0].mxu0
      %939 = vdwg.mxu0
      %v940 = vld [vmem:[%s1] sm:$0x3]
      %v943 = vunpack.c.l.s4 1966171168
      %v944 = vunpack.c.0.s8 %v943
      %v945 = vlaneseq
      %v946 = vshrl.u32 %v945, 7
      %v947 = vsub.s32 %v944, %v946
      %v948 = vrot.slane %v940, %v947
      %v949 = vcombine.high %v948, %v948
      %v951 = vunpack.c.l.s4 1966171168
      %v952 = vunpack.c.0.s8 %v951
      %v953 = vlaneseq
      %v954 = vshrl.u32 %v953, 7
      %v955 = vsub.s32 %v952, %v954
      %v956 = vrot.slane %v948, %v955
      %v958 = vunpack.c.l.s4 1966171168
      %v959 = vunpack.c.0.s8 %v958
      %v960 = vlaneseq
      %v961 = vshrl.u32 %v960, 7
      %v962 = vsub.s32 %v959, %v961
      %v963 = vrot.slane %v949, %v962
      %v964 = vpack.c.bf16 %v934, %v934
      %v965 = vpack.c.bf16 %v937, %v937
      %967 = vrot.lane.b32.xlu0 %v964, 96
      %v968 = vpop.permute.xlu0 %967
      %vm969 = vcmask 130048
      %v971 = vsel %vm969, %v964, 0
      %v974 = vsel %vm969, %v968, 0
      %976 = vmatprep.subr.bf16.mxu0 0
      %977 = vmatpush1.bf16.xpose.msra.mxu0 %v974
      %978 = vmatprep.subr.bf16.mxu0 0
      %979 = vmatpush1.bf16.xpose.msra.mxu0 0
      %980 = vmatprep.subr.bf16.mxu0 0
      %981 = vmatpush1.bf16.xpose.msra.mxu0 0
      %982 = vmatprep.subr.bf16.mxu0 0
      %983 = vmatpush1.bf16.xpose.msra.mxu0 0
      %984 = vmatprep.subr.bf16.mxu0 0
      %985 = vmatpush1.bf16.xpose.msra.mxu0 0
      %986 = vmatprep.subr.bf16.mxu0 0
      %987 = vmatpush1.bf16.xpose.msra.mxu0 0
      %988 = vmatprep.subr.bf16.mxu0 0
      %989 = vmatpush1.bf16.xpose.msra.mxu0 0
      %990 = vmatprep.subr.bf16.mxu0 0
      %991 = vmatpush1.bf16.xpose.msra.mxu0 0
      %992 = vmatprep.subr.bf16.mxu0 0
      %993 = vmatpush1.bf16.xpose.msra.mxu0 0
      %994 = vmatprep.subr.bf16.mxu0 0
      %995 = vmatpush1.bf16.xpose.msra.mxu0 0
      %996 = vmatprep.subr.bf16.mxu0 0
      %997 = vmatpush1.bf16.xpose.msra.mxu0 0
      %998 = vmatprep.subr.bf16.mxu0 0
      %999 = vmatpush1.bf16.xpose.msra.mxu0 0
      %1000 = vmatprep.subr.bf16.mxu0 0
      %1001 = vmatpush1.bf16.xpose.msra.mxu0 0
      %1002 = vmatprep.subr.bf16.mxu0 0
      %1003 = vmatpush1.bf16.xpose.msra.mxu0 0
      %1004 = vmatprep.subr.bf16.mxu0 0
      %1005 = vmatpush1.bf16.xpose.msra.mxu0 0
      %1006 = vmatprep.subr.bf16.mxu0 0
      %1007 = vmatpush1.bf16.xpose.msra.mxu0 0
      %1008 = vmatprep.mubr.bf16.mxu0 0
      %1009 = vmatmul.mubr.bf16.gmra.mrb[0].mxu0 %v971
      %v1010 = vpop.f32.mrb[0].mxu0
      %v1011 = vadd.f32 0.0, %v1010
      %v1012 = vpop.f32.mrb[0].mxu0
      %v1013 = vpop.f32.mrb[0].mxu0
      %v1014 = vpop.f32.mrb[0].mxu0
      %1015 = vdwg.mxu0
      %1017 = vrot.lane.b32.xlu0 %v965, 96
      %v1018 = vpop.permute.xlu0 %1017
      %v1020 = vsel %vm969, %v965, 0
      %v1023 = vsel %vm969, %v1018, 0
      %1025 = vmatprep.subr.bf16.mxu0 0
      %1026 = vmatpush1.bf16.xpose.msra.mxu0 %v1023
      %1027 = vmatprep.subr.bf16.mxu0 0
      %1028 = vmatpush1.bf16.xpose.msra.mxu0 0
      %1029 = vmatprep.subr.bf16.mxu0 0
      %1030 = vmatpush1.bf16.xpose.msra.mxu0 0
      %1031 = vmatprep.subr.bf16.mxu0 0
      %1032 = vmatpush1.bf16.xpose.msra.mxu0 0
      %1033 = vmatprep.subr.bf16.mxu0 0
      %1034 = vmatpush1.bf16.xpose.msra.mxu0 0
      %1035 = vmatprep.subr.bf16.mxu0 0
      %1036 = vmatpush1.bf16.xpose.msra.mxu0 0
      %1037 = vmatprep.subr.bf16.mxu0 0
      %1038 = vmatpush1.bf16.xpose.msra.mxu0 0
      %1039 = vmatprep.subr.bf16.mxu0 0
      %1040 = vmatpush1.bf16.xpose.msra.mxu0 0
      %1041 = vmatprep.subr.bf16.mxu0 0
      %1042 = vmatpush1.bf16.xpose.msra.mxu0 0
      %1043 = vmatprep.subr.bf16.mxu0 0
      %1044 = vmatpush1.bf16.xpose.msra.mxu0 0
      %1045 = vmatprep.subr.bf16.mxu0 0
      %1046 = vmatpush1.bf16.xpose.msra.mxu0 0
      %1047 = vmatprep.subr.bf16.mxu0 0
      %1048 = vmatpush1.bf16.xpose.msra.mxu0 0
      %1049 = vmatprep.subr.bf16.mxu0 0
      %1050 = vmatpush1.bf16.xpose.msra.mxu0 0
      %1051 = vmatprep.subr.bf16.mxu0 0
      %1052 = vmatpush1.bf16.xpose.msra.mxu0 0
      %1053 = vmatprep.subr.bf16.mxu0 0
      %1054 = vmatpush1.bf16.xpose.msra.mxu0 0
      %1055 = vmatprep.subr.bf16.mxu0 0
      %1056 = vmatpush1.bf16.xpose.msra.mxu0 0
      %1057 = vmatprep.mubr.bf16.mxu0 0
      %1058 = vmatmul.mubr.bf16.gmra.mrb[0].mxu0 %v1020
      %v1059 = vpop.f32.mrb[0].mxu0
      %v1060 = vadd.f32 0.0, %v1059
      %v1061 = vpop.f32.mrb[0].mxu0
      %v1062 = vpop.f32.mrb[0].mxu0
      %v1063 = vpop.f32.mrb[0].mxu0
      %1064 = vdwg.mxu0
      %v1065 = vmul.f32 %v1011, 0.25
      %v1066 = vmul.f32 %v1060, 0.25
      %v1067 = vlaneseq
      %v1068 = vshrl.u32 %v1067, 7
      %v1069 = vsub.s32 0, %v1068
      %v1070 = vrot.slane %v956, %v1069
      %v1071 = vlaneseq
      %v1072 = vshrl.u32 %v1071, 7
      %v1073 = vsub.s32 0, %v1072
      %v1074 = vrot.slane %v963, %v1073
      %v1077 = vadd.f32 %v1065, %v1070
      %v1078 = vadd.f32 %v1066, %v1074
      %vm1079 = vcmask 64512
      %v1080 = vsel %vm1079, %v1077, -inf
      %1081 = vmax.xlane.f32.xlu0 %v1080
      %v1082 = vpop.xlane.xlu0 %1081
      %v1083 = vsel %vm1079, %v1078, -inf
      %1084 = vmax.xlane.f32.xlu0 %v1083
      %v1085 = vpop.xlane.xlu0 %1084
      %v1086 = vsub.f32 %v1077, %v1082
      %v1087 = vsub.f32 %v1078, %v1085
      %v1088 = vmul.f32 %v1086, 1.442695
      %v1089 = vpow.pop %v1088
      %v1090 = vmul.f32 %v1087, 1.442695
      %v1091 = vpow.pop %v1090
      %v1092 = vsel %vm1079, %v1089, 0.0
      %1093 = vadd.xlane.f32.xlu0 %v1092
      %v1094 = vpop.xlane.xlu0 %1093
      %v1095 = vsel %vm1079, %v1091, 0.0
      %1096 = vadd.xlane.f32.xlu0 %v1095
      %v1097 = vpop.xlane.xlu0 %1096
      %v1098 = vrcp.pop %v1094
      %v1099 = vrcp.pop %v1097
      %v1100 = vmul.f32 %v1089, %v1098
      %v1101 = vmul.f32 %v1091, %v1099
      %v1102 = vpack.c.bf16 %v1100, %v1100
      %v1103 = vpack.c.bf16 %v1101, %v1101
      %1104 = vrot.lane.b32.xlu0 %v964, 64
      %v1105 = vpop.permute.xlu0 %1104
      %v1107 = vsel %vm1079, %v1102, 0
      %vm1109 = vcmask 1043456
      %v1111 = vsel %vm1109, %v1105, 0
      %1113 = vmatprep.subr.bf16.mxu0 0
      %1114 = vmatpush1.bf16.msra.mxu0 %v1111
      %1115 = vmatprep.subr.bf16.mxu0 0
      %1116 = vmatpush1.bf16.msra.mxu0 0
      %1117 = vmatprep.subr.bf16.mxu0 0
      %1118 = vmatpush1.bf16.msra.mxu0 0
      %1119 = vmatprep.subr.bf16.mxu0 0
      %1120 = vmatpush1.bf16.msra.mxu0 0
      %1121 = vmatprep.subr.bf16.mxu0 0
      %1122 = vmatpush1.bf16.msra.mxu0 0
      %1123 = vmatprep.subr.bf16.mxu0 0
      %1124 = vmatpush1.bf16.msra.mxu0 0
      %1125 = vmatprep.subr.bf16.mxu0 0
      %1126 = vmatpush1.bf16.msra.mxu0 0
      %1127 = vmatprep.subr.bf16.mxu0 0
      %1128 = vmatpush1.bf16.msra.mxu0 0
      %1129 = vmatprep.subr.bf16.mxu0 0
      %1130 = vmatpush1.bf16.msra.mxu0 0
      %1131 = vmatprep.subr.bf16.mxu0 0
      %1132 = vmatpush1.bf16.msra.mxu0 0
      %1133 = vmatprep.subr.bf16.mxu0 0
      %1134 = vmatpush1.bf16.msra.mxu0 0
      %1135 = vmatprep.subr.bf16.mxu0 0
      %1136 = vmatpush1.bf16.msra.mxu0 0
      %1137 = vmatprep.subr.bf16.mxu0 0
      %1138 = vmatpush1.bf16.msra.mxu0 0
      %1139 = vmatprep.subr.bf16.mxu0 0
      %1140 = vmatpush1.bf16.msra.mxu0 0
      %1141 = vmatprep.subr.bf16.mxu0 0
      %1142 = vmatpush1.bf16.msra.mxu0 0
      %1143 = vmatprep.subr.bf16.mxu0 0
      %1144 = vmatpush1.bf16.msra.mxu0 0
      %1145 = vmatprep.mubr.bf16.mxu0 0
      %1146 = vmatmul.mubr.bf16.gmra.mrb[0].mxu0 %v1107
      %v1147 = vpop.f32.mrb[0].mxu0
      %v1148 = vadd.f32 0.0, %v1147
      %v1149 = vpop.f32.mrb[0].mxu0
      %v1150 = vpop.f32.mrb[0].mxu0
      %v1151 = vpop.f32.mrb[0].mxu0
      %1152 = vdwg.mxu0
      %1153 = vrot.lane.b32.xlu0 %v965, 64
      %v1154 = vpop.permute.xlu0 %1153
      %v1156 = vsel %vm1079, %v1103, 0
      %v1159 = vsel %vm1109, %v1154, 0
      %1161 = vmatprep.subr.bf16.mxu0 0
      %1162 = vmatpush1.bf16.msra.mxu0 %v1159
      %1163 = vmatprep.subr.bf16.mxu0 0
      %1164 = vmatpush1.bf16.msra.mxu0 0
      %1165 = vmatprep.subr.bf16.mxu0 0
      %1166 = vmatpush1.bf16.msra.mxu0 0
      %1167 = vmatprep.subr.bf16.mxu0 0
      %1168 = vmatpush1.bf16.msra.mxu0 0
      %1169 = vmatprep.subr.bf16.mxu0 0
      %1170 = vmatpush1.bf16.msra.mxu0 0
      %1171 = vmatprep.subr.bf16.mxu0 0
      %1172 = vmatpush1.bf16.msra.mxu0 0
      %1173 = vmatprep.subr.bf16.mxu0 0
      %1174 = vmatpush1.bf16.msra.mxu0 0
      %1175 = vmatprep.subr.bf16.mxu0 0
      %1176 = vmatpush1.bf16.msra.mxu0 0
      %1177 = vmatprep.subr.bf16.mxu0 0
      %1178 = vmatpush1.bf16.msra.mxu0 0
      %1179 = vmatprep.subr.bf16.mxu0 0
      %1180 = vmatpush1.bf16.msra.mxu0 0
      %1181 = vmatprep.subr.bf16.mxu0 0
      %1182 = vmatpush1.bf16.msra.mxu0 0
      %1183 = vmatprep.subr.bf16.mxu0 0
      %1184 = vmatpush1.bf16.msra.mxu0 0
      %1185 = vmatprep.subr.bf16.mxu0 0
      %1186 = vmatpush1.bf16.msra.mxu0 0
      %1187 = vmatprep.subr.bf16.mxu0 0
      %1188 = vmatpush1.bf16.msra.mxu0 0
      %1189 = vmatprep.subr.bf16.mxu0 0
      %1190 = vmatpush1.bf16.msra.mxu0 0
      %1191 = vmatprep.subr.bf16.mxu0 0
      %1192 = vmatpush1.bf16.msra.mxu0 0
      %1193 = vmatprep.mubr.bf16.mxu0 0
      %1194 = vmatmul.mubr.bf16.gmra.mrb[0].mxu0 %v1156
      %v1195 = vpop.f32.mrb[0].mxu0
      %v1196 = vadd.f32 0.0, %v1195
      %v1197 = vpop.f32.mrb[0].mxu0
      %v1198 = vpop.f32.mrb[0].mxu0
      %v1199 = vpop.f32.mrb[0].mxu0
      %1200 = vdwg.mxu0
      %1201 = vrot.lane.b32.xlu0 %v964, 112
      %v1202 = vpop.permute.xlu0 %1201
      %1203 = vrot.lane.b32.xlu0 %v964, 80
      %v1204 = vpop.permute.xlu0 %1203
      %v1206 = vsel %vm969, %v1202, 0
      %v1209 = vsel %vm969, %v1204, 0
      %1211 = vmatprep.subr.bf16.mxu0 0
      %1212 = vmatpush1.bf16.xpose.msra.mxu0 %v1209
      %1213 = vmatprep.subr.bf16.mxu0 0
      %1214 = vmatpush1.bf16.xpose.msra.mxu0 0
      %1215 = vmatprep.subr.bf16.mxu0 0
      %1216 = vmatpush1.bf16.xpose.msra.mxu0 0
      %1217 = vmatprep.subr.bf16.mxu0 0
      %1218 = vmatpush1.bf16.xpose.msra.mxu0 0
      %1219 = vmatprep.subr.bf16.mxu0 0
      %1220 = vmatpush1.bf16.xpose.msra.mxu0 0
      %1221 = vmatprep.subr.bf16.mxu0 0
      %1222 = vmatpush1.bf16.xpose.msra.mxu0 0
      %1223 = vmatprep.subr.bf16.mxu0 0
      %1224 = vmatpush1.bf16.xpose.msra.mxu0 0
      %1225 = vmatprep.subr.bf16.mxu0 0
      %1226 = vmatpush1.bf16.xpose.msra.mxu0 0
      %1227 = vmatprep.subr.bf16.mxu0 0
      %1228 = vmatpush1.bf16.xpose.msra.mxu0 0
      %1229 = vmatprep.subr.bf16.mxu0 0
      %1230 = vmatpush1.bf16.xpose.msra.mxu0 0
      %1231 = vmatprep.subr.bf16.mxu0 0
      %1232 = vmatpush1.bf16.xpose.msra.mxu0 0
      %1233 = vmatprep.subr.bf16.mxu0 0
      %1234 = vmatpush1.bf16.xpose.msra.mxu0 0
      %1235 = vmatprep.subr.bf16.mxu0 0
      %1236 = vmatpush1.bf16.xpose.msra.mxu0 0
      %1237 = vmatprep.subr.bf16.mxu0 0
      %1238 = vmatpush1.bf16.xpose.msra.mxu0 0
      %1239 = vmatprep.subr.bf16.mxu0 0
      %1240 = vmatpush1.bf16.xpose.msra.mxu0 0
      %1241 = vmatprep.subr.bf16.mxu0 0
      %1242 = vmatpush1.bf16.xpose.msra.mxu0 0
      %1243 = vmatprep.mubr.bf16.mxu0 0
      %1244 = vmatmul.mubr.bf16.gmra.mrb[0].mxu0 %v1206
      %v1245 = vpop.f32.mrb[0].mxu0
      %v1246 = vadd.f32 0.0, %v1245
      %v1247 = vpop.f32.mrb[0].mxu0
      %v1248 = vpop.f32.mrb[0].mxu0
      %v1249 = vpop.f32.mrb[0].mxu0
      %1250 = vdwg.mxu0
      %1251 = vrot.lane.b32.xlu0 %v965, 112
      %v1252 = vpop.permute.xlu0 %1251
      %1253 = vrot.lane.b32.xlu0 %v965, 80
      %v1254 = vpop.permute.xlu0 %1253
      %v1256 = vsel %vm969, %v1252, 0
      %v1259 = vsel %vm969, %v1254, 0
      %1261 = vmatprep.subr.bf16.mxu0 0
      %1262 = vmatpush1.bf16.xpose.msra.mxu0 %v1259
      %1263 = vmatprep.subr.bf16.mxu0 0
      %1264 = vmatpush1.bf16.xpose.msra.mxu0 0
      %1265 = vmatprep.subr.bf16.mxu0 0
      %1266 = vmatpush1.bf16.xpose.msra.mxu0 0
      %1267 = vmatprep.subr.bf16.mxu0 0
      %1268 = vmatpush1.bf16.xpose.msra.mxu0 0
      %1269 = vmatprep.subr.bf16.mxu0 0
      %1270 = vmatpush1.bf16.xpose.msra.mxu0 0
      %1271 = vmatprep.subr.bf16.mxu0 0
      %1272 = vmatpush1.bf16.xpose.msra.mxu0 0
      %1273 = vmatprep.subr.bf16.mxu0 0
      %1274 = vmatpush1.bf16.xpose.msra.mxu0 0
      %1275 = vmatprep.subr.bf16.mxu0 0
      %1276 = vmatpush1.bf16.xpose.msra.mxu0 0
      %1277 = vmatprep.subr.bf16.mxu0 0
      %1278 = vmatpush1.bf16.xpose.msra.mxu0 0
      %1279 = vmatprep.subr.bf16.mxu0 0
      %1280 = vmatpush1.bf16.xpose.msra.mxu0 0
      %1281 = vmatprep.subr.bf16.mxu0 0
      %1282 = vmatpush1.bf16.xpose.msra.mxu0 0
      %1283 = vmatprep.subr.bf16.mxu0 0
      %1284 = vmatpush1.bf16.xpose.msra.mxu0 0
      %1285 = vmatprep.subr.bf16.mxu0 0
      %1286 = vmatpush1.bf16.xpose.msra.mxu0 0
      %1287 = vmatprep.subr.bf16.mxu0 0
      %1288 = vmatpush1.bf16.xpose.msra.mxu0 0
      %1289 = vmatprep.subr.bf16.mxu0 0
      %1290 = vmatpush1.bf16.xpose.msra.mxu0 0
      %1291 = vmatprep.subr.bf16.mxu0 0
      %1292 = vmatpush1.bf16.xpose.msra.mxu0 0
      %1293 = vmatprep.mubr.bf16.mxu0 0
      %1294 = vmatmul.mubr.bf16.gmra.mrb[0].mxu0 %v1256
      %v1295 = vpop.f32.mrb[0].mxu0
      %v1296 = vadd.f32 0.0, %v1295
      %v1297 = vpop.f32.mrb[0].mxu0
      %v1298 = vpop.f32.mrb[0].mxu0
      %v1299 = vpop.f32.mrb[0].mxu0
      %1300 = vdwg.mxu0
      %v1301 = vmul.f32 %v1246, 0.25
      %v1302 = vmul.f32 %v1296, 0.25
      %v1303 = vadd.f32 %v1301, %v1070
      %v1304 = vadd.f32 %v1302, %v1074
      %v1305 = vsel %vm1079, %v1303, -inf
      %1306 = vmax.xlane.f32.xlu0 %v1305
      %v1307 = vpop.xlane.xlu0 %1306
      %v1308 = vsel %vm1079, %v1304, -inf
      %1309 = vmax.xlane.f32.xlu0 %v1308
      %v1310 = vpop.xlane.xlu0 %1309
      %v1311 = vsub.f32 %v1303, %v1307
      %v1312 = vsub.f32 %v1304, %v1310
      %v1313 = vmul.f32 %v1311, 1.442695
      %v1314 = vpow.pop %v1313
      %v1315 = vmul.f32 %v1312, 1.442695
      %v1316 = vpow.pop %v1315
      %v1317 = vsel %vm1079, %v1314, 0.0
      %1318 = vadd.xlane.f32.xlu0 %v1317
      %v1319 = vpop.xlane.xlu0 %1318
      %v1320 = vsel %vm1079, %v1316, 0.0
      %1321 = vadd.xlane.f32.xlu0 %v1320
      %v1322 = vpop.xlane.xlu0 %1321
      %v1323 = vrcp.pop %v1319
      %v1324 = vrcp.pop %v1322
      %v1325 = vmul.f32 %v1314, %v1323
      %v1326 = vmul.f32 %v1316, %v1324
      %v1327 = vpack.c.bf16 %v1325, %v1325
      %v1328 = vpack.c.bf16 %v1326, %v1326
      %1329 = vrot.lane.b32.xlu0 %v964, 48
      %v1330 = vpop.permute.xlu0 %1329
      %v1332 = vsel %vm1079, %v1327, 0
      %v1335 = vsel %vm1109, %v1330, 0
      %1337 = vmatprep.subr.bf16.mxu0 0
      %1338 = vmatpush1.bf16.msra.mxu0 %v1335
      %1339 = vmatprep.subr.bf16.mxu0 0
      %1340 = vmatpush1.bf16.msra.mxu0 0
      %1341 = vmatprep.subr.bf16.mxu0 0
      %1342 = vmatpush1.bf16.msra.mxu0 0
      %1343 = vmatprep.subr.bf16.mxu0 0
      %1344 = vmatpush1.bf16.msra.mxu0 0
      %1345 = vmatprep.subr.bf16.mxu0 0
      %1346 = vmatpush1.bf16.msra.mxu0 0
      %1347 = vmatprep.subr.bf16.mxu0 0
      %1348 = vmatpush1.bf16.msra.mxu0 0
      %1349 = vmatprep.subr.bf16.mxu0 0
      %1350 = vmatpush1.bf16.msra.mxu0 0
      %1351 = vmatprep.subr.bf16.mxu0 0
      %1352 = vmatpush1.bf16.msra.mxu0 0
      %1353 = vmatprep.subr.bf16.mxu0 0
      %1354 = vmatpush1.bf16.msra.mxu0 0
      %1355 = vmatprep.subr.bf16.mxu0 0
      %1356 = vmatpush1.bf16.msra.mxu0 0
      %1357 = vmatprep.subr.bf16.mxu0 0
      %1358 = vmatpush1.bf16.msra.mxu0 0
      %1359 = vmatprep.subr.bf16.mxu0 0
      %1360 = vmatpush1.bf16.msra.mxu0 0
      %1361 = vmatprep.subr.bf16.mxu0 0
      %1362 = vmatpush1.bf16.msra.mxu0 0
      %1363 = vmatprep.subr.bf16.mxu0 0
      %1364 = vmatpush1.bf16.msra.mxu0 0
      %1365 = vmatprep.subr.bf16.mxu0 0
      %1366 = vmatpush1.bf16.msra.mxu0 0
      %1367 = vmatprep.subr.bf16.mxu0 0
      %1368 = vmatpush1.bf16.msra.mxu0 0
      %1369 = vmatprep.mubr.bf16.mxu0 0
      %1370 = vmatmul.mubr.bf16.gmra.mrb[0].mxu0 %v1332
      %v1371 = vpop.f32.mrb[0].mxu0
      %v1372 = vadd.f32 0.0, %v1371
      %v1373 = vpop.f32.mrb[0].mxu0
      %v1374 = vpop.f32.mrb[0].mxu0
      %v1375 = vpop.f32.mrb[0].mxu0
      %1376 = vdwg.mxu0
      %1377 = vrot.lane.b32.xlu0 %v965, 48
      %v1378 = vpop.permute.xlu0 %1377
      %v1380 = vsel %vm1079, %v1328, 0
      %v1383 = vsel %vm1109, %v1378, 0
      %1385 = vmatprep.subr.bf16.mxu0 0
      %1386 = vmatpush1.bf16.msra.mxu0 %v1383
      %1387 = vmatprep.subr.bf16.mxu0 0
      %1388 = vmatpush1.bf16.msra.mxu0 0
      %1389 = vmatprep.subr.bf16.mxu0 0
      %1390 = vmatpush1.bf16.msra.mxu0 0
      %1391 = vmatprep.subr.bf16.mxu0 0
      %1392 = vmatpush1.bf16.msra.mxu0 0
      %1393 = vmatprep.subr.bf16.mxu0 0
      %1394 = vmatpush1.bf16.msra.mxu0 0
      %1395 = vmatprep.subr.bf16.mxu0 0
      %1396 = vmatpush1.bf16.msra.mxu0 0
      %1397 = vmatprep.subr.bf16.mxu0 0
      %1398 = vmatpush1.bf16.msra.mxu0 0
      %1399 = vmatprep.subr.bf16.mxu0 0
      %1400 = vmatpush1.bf16.msra.mxu0 0
      %1401 = vmatprep.subr.bf16.mxu0 0
      %1402 = vmatpush1.bf16.msra.mxu0 0
      %1403 = vmatprep.subr.bf16.mxu0 0
      %1404 = vmatpush1.bf16.msra.mxu0 0
      %1405 = vmatprep.subr.bf16.mxu0 0
      %1406 = vmatpush1.bf16.msra.mxu0 0
      %1407 = vmatprep.subr.bf16.mxu0 0
      %1408 = vmatpush1.bf16.msra.mxu0 0
      %1409 = vmatprep.subr.bf16.mxu0 0
      %1410 = vmatpush1.bf16.msra.mxu0 0
      %1411 = vmatprep.subr.bf16.mxu0 0
      %1412 = vmatpush1.bf16.msra.mxu0 0
      %1413 = vmatprep.subr.bf16.mxu0 0
      %1414 = vmatpush1.bf16.msra.mxu0 0
      %1415 = vmatprep.subr.bf16.mxu0 0
      %1416 = vmatpush1.bf16.msra.mxu0 0
      %1417 = vmatprep.mubr.bf16.mxu0 0
      %1418 = vmatmul.mubr.bf16.gmra.mrb[0].mxu0 %v1380
      %v1419 = vpop.f32.mrb[0].mxu0
      %v1420 = vadd.f32 0.0, %v1419
      %v1421 = vpop.f32.mrb[0].mxu0
      %v1422 = vpop.f32.mrb[0].mxu0
      %v1423 = vpop.f32.mrb[0].mxu0
      %1424 = vdwg.mxu0
      %1427 = vrot.lane.b32.xlu0 %v1372, 16
      %v1428 = vpop.permute.xlu0 %1427
      %1429 = vrot.lane.b32.xlu0 %v1420, 16
      %v1430 = vpop.permute.xlu0 %1429
      %v1433 = vsel %vm969, %v1148, %v1428
      %v1434 = vsel %vm969, %v1196, %v1430
      %v1435 = vpack.c.bf16 %v1434, %v1433
      %v1436 = vld [vmem:[%s782] sm:$0xf]
      %v1437 = vld [vmem:[%s782 + $0x4] sm:$0xf]
      %v1438 = vld [vmem:[%s782 + $0x8] sm:$0xf]
      %v1439 = vld [vmem:[%s782 + $0xc] sm:$0xf]
      %v1440 = vld [vmem:[%s785] sm:$0x1]
      %v1442 = vlaneseq
      %v1443 = vshrl.u32 %v1442, 7
      %v1444 = vsub.s32 0, %v1443
      %v1445 = vrot.slane %v1440, %v1444
      %v1451 = vunpack.c.l.b16 %v1436
      %v1452 = vunpack.c.l.b16 %v1437
      %v1453 = vunpack.c.l.b16 %v1438
      %v1454 = vunpack.c.l.b16 %v1439
      %v1455 = vpack.c.b16 %v1452, %v1451
      %v1456 = vpack.c.b16 %v1454, %v1453
      %v1460 = vsel %vm895, %v1435, 0
      %1462 = vmatprep.subr.bf16.mxu0 0
      %1463 = vmatpush1.bf16.msra.mxu0 %v1455
      %1464 = vmatprep.subr.bf16.mxu0 0
      %1465 = vmatpush1.bf16.msra.mxu0 %v1456
      %1466 = vmatprep.subr.bf16.mxu0 0
      %1467 = vmatpush1.bf16.msra.mxu0 0
      %1468 = vmatprep.subr.bf16.mxu0 0
      %1469 = vmatpush1.bf16.msra.mxu0 0
      %1470 = vmatprep.subr.bf16.mxu0 0
      %1471 = vmatpush1.bf16.msra.mxu0 0
      %1472 = vmatprep.subr.bf16.mxu0 0
      %1473 = vmatpush1.bf16.msra.mxu0 0
      %1474 = vmatprep.subr.bf16.mxu0 0
      %1475 = vmatpush1.bf16.msra.mxu0 0
      %1476 = vmatprep.subr.bf16.mxu0 0
      %1477 = vmatpush1.bf16.msra.mxu0 0
      %1478 = vmatprep.subr.bf16.mxu0 0
      %1479 = vmatpush1.bf16.msra.mxu0 0
      %1480 = vmatprep.subr.bf16.mxu0 0
      %1481 = vmatpush1.bf16.msra.mxu0 0
      %1482 = vmatprep.subr.bf16.mxu0 0
      %1483 = vmatpush1.bf16.msra.mxu0 0
      %1484 = vmatprep.subr.bf16.mxu0 0
      %1485 = vmatpush1.bf16.msra.mxu0 0
      %1486 = vmatprep.subr.bf16.mxu0 0
      %1487 = vmatpush1.bf16.msra.mxu0 0
      %1488 = vmatprep.subr.bf16.mxu0 0
      %1489 = vmatpush1.bf16.msra.mxu0 0
      %1490 = vmatprep.subr.bf16.mxu0 0
      %1491 = vmatpush1.bf16.msra.mxu0 0
      %1492 = vmatprep.subr.bf16.mxu0 0
      %1493 = vmatpush1.bf16.msra.mxu0 0
      %1494 = vmatprep.mubr.bf16.mxu0 0
      %1495 = vmatmul.mubr.bf16.gmra.mrb[0].mxu0 %v1460
      %v1496 = vpop.f32.mrb[0].mxu0
      %v1497 = vadd.f32 %v1445, %v1496
      %v1498 = vpop.f32.mrb[0].mxu0
      %v1499 = vpop.f32.mrb[0].mxu0
      %v1500 = vadd.f32 %v1445, %v1499
      %v1501 = vpop.f32.mrb[0].mxu0
      %1502 = vdwg.mxu0
      %v1503 = vadd.f32 %v1497, %v869
      %v1504 = vadd.f32 %v1500, %v870
      %v1505 = vld [vmem:[%s788] sm:$0x1]
      %v1506 = vld [vmem:[%s791] sm:$0x1]
      %v1507 = vsel %vm895, %v1503, 0.0
      %1508 = vadd.xlane.f32.xlu0 %v1507
      %v1509 = vpop.xlane.xlu0 %1508
      %v1510 = vsel %vm895, %v1504, 0.0
      %1511 = vadd.xlane.f32.xlu0 %v1510
      %v1512 = vpop.xlane.xlu0 %1511
      %v1513 = vrcp.pop 32.0
      %v1514 = vmul.f32 %v1509, %v1513
      %v1515 = vmul.f32 %v1512, %v1513
      %v1516 = vsub.f32 %v1503, %v1514
      %v1517 = vsub.f32 %v1504, %v1515
      %v1518 = vmul.f32 %v1516, %v1516
      %v1519 = vmul.f32 %v1517, %v1517
      %v1520 = vsel %vm895, %v1518, 0.0
      %1521 = vadd.xlane.f32.xlu0 %v1520
      %v1522 = vpop.xlane.xlu0 %1521
      %v1523 = vsel %vm895, %v1519, 0.0
      %1524 = vadd.xlane.f32.xlu0 %v1523
      %v1525 = vpop.xlane.xlu0 %1524
      %v1526 = vmul.f32 %v1522, %v1513
      %v1527 = vmul.f32 %v1525, %v1513
      %v1528 = vadd.f32 %v1526, 1e-12
      %v1529 = vadd.f32 %v1527, 1e-12
      %v1530 = vrsqrt.pop %v1528
      %v1531 = vrsqrt.pop %v1529
      %v1532 = vmul.f32 %v1516, %v1530
      %v1533 = vmul.f32 %v1517, %v1531
      %v1535 = vlaneseq
      %v1536 = vshrl.u32 %v1535, 7
      %v1537 = vsub.s32 0, %v1536
      %v1538 = vrot.slane %v1505, %v1537
      %v1540 = vmul.f32 %v1532, %v1538
      %v1541 = vmul.f32 %v1533, %v1538
      %v1543 = vlaneseq
      %v1544 = vshrl.u32 %v1543, 7
      %v1545 = vsub.s32 0, %v1544
      %v1546 = vrot.slane %v1506, %v1545
      %v1548 = vadd.f32 %v1540, %v1546
      %v1549 = vadd.f32 %v1541, %v1546
      %v1550 = vpack.c.bf16 %v1549, %v1548
      %v1551 = vld [vmem:[%s796] sm:$0xf]
      %v1552 = vld [vmem:[%s796 + $0x4] sm:$0xf]
      %v1553 = vld [vmem:[%s796 + $0x8] sm:$0xf]
      %v1554 = vld [vmem:[%s796 + $0xc] sm:$0xf]
      %v1555 = vld [vmem:[%s799] sm:$0x1]
      %v1557 = vlaneseq
      %v1558 = vshrl.u32 %v1557, 7
      %v1559 = vsub.s32 0, %v1558
      %v1560 = vrot.slane %v1555, %v1559
      %v1566 = vunpack.c.l.b16 %v1551
      %v1567 = vunpack.c.l.b16 %v1552
      %v1568 = vunpack.c.l.b16 %v1553
      %v1569 = vunpack.c.l.b16 %v1554
      %v1570 = vpack.c.b16 %v1567, %v1566
      %v1571 = vpack.c.b16 %v1569, %v1568
      %v1575 = vsel %vm895, %v1550, 0
      %1577 = vmatprep.subr.bf16.mxu0 0
      %1578 = vmatpush1.bf16.msra.mxu0 %v1570
      %1579 = vmatprep.subr.bf16.mxu0 0
      %1580 = vmatpush1.bf16.msra.mxu0 %v1571
      %1581 = vmatprep.subr.bf16.mxu0 0
      %1582 = vmatpush1.bf16.msra.mxu0 0
      %1583 = vmatprep.subr.bf16.mxu0 0
      %1584 = vmatpush1.bf16.msra.mxu0 0
      %1585 = vmatprep.subr.bf16.mxu0 0
      %1586 = vmatpush1.bf16.msra.mxu0 0
      %1587 = vmatprep.subr.bf16.mxu0 0
      %1588 = vmatpush1.bf16.msra.mxu0 0
      %1589 = vmatprep.subr.bf16.mxu0 0
      %1590 = vmatpush1.bf16.msra.mxu0 0
      %1591 = vmatprep.subr.bf16.mxu0 0
      %1592 = vmatpush1.bf16.msra.mxu0 0
      %1593 = vmatprep.subr.bf16.mxu0 0
      %1594 = vmatpush1.bf16.msra.mxu0 0
      %1595 = vmatprep.subr.bf16.mxu0 0
      %1596 = vmatpush1.bf16.msra.mxu0 0
      %1597 = vmatprep.subr.bf16.mxu0 0
      %1598 = vmatpush1.bf16.msra.mxu0 0
      %1599 = vmatprep.subr.bf16.mxu0 0
      %1600 = vmatpush1.bf16.msra.mxu0 0
      %1601 = vmatprep.subr.bf16.mxu0 0
      %1602 = vmatpush1.bf16.msra.mxu0 0
      %1603 = vmatprep.subr.bf16.mxu0 0
      %1604 = vmatpush1.bf16.msra.mxu0 0
      %1605 = vmatprep.subr.bf16.mxu0 0
      %1606 = vmatpush1.bf16.msra.mxu0 0
      %1607 = vmatprep.subr.bf16.mxu0 0
      %1608 = vmatpush1.bf16.msra.mxu0 0
      %1609 = vmatprep.mubr.bf16.mxu0 0
      %1610 = vmatmul.mubr.bf16.gmra.mrb[0].mxu0 %v1575
      %v1611 = vpop.f32.mrb[0].mxu0
      %v1612 = vadd.f32 %v1560, %v1611
      %v1613 = vpop.f32.mrb[0].mxu0
      %v1614 = vpop.f32.mrb[0].mxu0
      %v1615 = vadd.f32 %v1560, %v1614
      %v1616 = vpop.f32.mrb[0].mxu0
      %1617 = vdwg.mxu0
      %v1618 = vmul.f32 %v1612, %v1612
      %v1619 = vmul.f32 %v1615, %v1615
      %v1620 = vmul.f32 %v1612, %v1618
      %v1621 = vmul.f32 %v1615, %v1619
      %v1622 = vmul.f32 %v1620, 0.044715
      %v1623 = vmul.f32 %v1621, 0.044715
      %v1624 = vadd.f32 %v1612, %v1622
      %v1625 = vadd.f32 %v1615, %v1623
      %v1626 = vmul.f32 %v1624, 0.7978846
      %v1627 = vmul.f32 %v1625, 0.7978846
      %v1628 = vtanh.pop %v1626
      %v1629 = vtanh.pop %v1627
      %v1630 = vadd.f32 %v1628, 1.0
      %v1631 = vadd.f32 %v1629, 1.0
      %v1632 = vmul.f32 %v1630, 0.5
      %v1633 = vmul.f32 %v1631, 0.5
      %v1634 = vmul.f32 %v1612, %v1632
      %v1635 = vmul.f32 %v1615, %v1633
      %v1636 = vpack.c.bf16 %v1635, %v1634
      %v1637 = vld [vmem:[%s804] sm:$0xf]
      %v1638 = vld [vmem:[%s804 + $0x4] sm:$0xf]
      %v1639 = vld [vmem:[%s804 + $0x8] sm:$0xf]
      %v1640 = vld [vmem:[%s804 + $0xc] sm:$0xf]
      %v1641 = vld [vmem:[%s804 + $0x10] sm:$0xf]
      %v1642 = vld [vmem:[%s804 + $0x14] sm:$0xf]
      %v1643 = vld [vmem:[%s804 + $0x18] sm:$0xf]
      %v1644 = vld [vmem:[%s804 + $0x1c] sm:$0xf]
      %v1645 = vld [vmem:[%s807] sm:$0x1]
      %v1647 = vlaneseq
      %v1648 = vshrl.u32 %v1647, 7
      %v1649 = vsub.s32 0, %v1648
      %v1650 = vrot.slane %v1645, %v1649
      %v1660 = vunpack.c.l.b16 %v1637
      %v1661 = vunpack.c.l.b16 %v1638
      %v1662 = vunpack.c.l.b16 %v1639
      %v1663 = vunpack.c.l.b16 %v1640
      %v1664 = vunpack.c.l.b16 %v1641
      %v1665 = vunpack.c.l.b16 %v1642
      %v1666 = vunpack.c.l.b16 %v1643
      %v1667 = vunpack.c.l.b16 %v1644
      %v1668 = vpack.c.b16 %v1661, %v1660
      %v1669 = vpack.c.b16 %v1663, %v1662
      %v1670 = vpack.c.b16 %v1665, %v1664
      %v1671 = vpack.c.b16 %v1667, %v1666
      %vm1676 = vcmask 523264
      %v1678 = vsel %vm1676, %v1636, 0
      %1680 = vmatprep.subr.bf16.mxu0 0
      %1681 = vmatpush1.bf16.msra.mxu0 %v1668
      %1682 = vmatprep.subr.bf16.mxu0 0
      %1683 = vmatpush1.bf16.msra.mxu0 %v1669
      %1684 = vmatprep.subr.bf16.mxu0 0
      %1685 = vmatpush1.bf16.msra.mxu0 %v1670
      %1686 = vmatprep.subr.bf16.mxu0 0
      %1687 = vmatpush1.bf16.msra.mxu0 %v1671
      %1688 = vmatprep.subr.bf16.mxu0 0
      %1689 = vmatpush1.bf16.msra.mxu0 0
      %1690 = vmatprep.subr.bf16.mxu0 0
      %1691 = vmatpush1.bf16.msra.mxu0 0
      %1692 = vmatprep.subr.bf16.mxu0 0
      %1693 = vmatpush1.bf16.msra.mxu0 0
      %1694 = vmatprep.subr.bf16.mxu0 0
      %1695 = vmatpush1.bf16.msra.mxu0 0
      %1696 = vmatprep.subr.bf16.mxu0 0
      %1697 = vmatpush1.bf16.msra.mxu0 0
      %1698 = vmatprep.subr.bf16.mxu0 0
      %1699 = vmatpush1.bf16.msra.mxu0 0
      %1700 = vmatprep.subr.bf16.mxu0 0
      %1701 = vmatpush1.bf16.msra.mxu0 0
      %1702 = vmatprep.subr.bf16.mxu0 0
      %1703 = vmatpush1.bf16.msra.mxu0 0
      %1704 = vmatprep.subr.bf16.mxu0 0
      %1705 = vmatpush1.bf16.msra.mxu0 0
      %1706 = vmatprep.subr.bf16.mxu0 0
      %1707 = vmatpush1.bf16.msra.mxu0 0
      %1708 = vmatprep.subr.bf16.mxu0 0
      %1709 = vmatpush1.bf16.msra.mxu0 0
      %1710 = vmatprep.subr.bf16.mxu0 0
      %1711 = vmatpush1.bf16.msra.mxu0 0
      %1712 = vmatprep.mubr.bf16.mxu0 0
      %1713 = vmatmul.mubr.bf16.gmra.mrb[0].mxu0 %v1678
      %v1714 = vpop.f32.mrb[0].mxu0
      %v1715 = vadd.f32 %v1650, %v1714
      %v1716 = vpop.f32.mrb[0].mxu0
      %v1717 = vpop.f32.mrb[0].mxu0
      %v1718 = vadd.f32 %v1650, %v1717
      %v1719 = vpop.f32.mrb[0].mxu0
      %1720 = vdwg.mxu0
      %v1721 = vadd.f32 %v1715, %v1548
      %v1722 = vadd.f32 %v1718, %v1549
      %v1723 = vld [vmem:[%s810] sm:$0x1]
      %v1724 = vld [vmem:[%s813] sm:$0x1]
      %v1725 = vsel %vm895, %v1721, 0.0
      %1726 = vadd.xlane.f32.xlu0 %v1725
      %v1727 = vpop.xlane.xlu0 %1726
      %v1728 = vsel %vm895, %v1722, 0.0
      %1729 = vadd.xlane.f32.xlu0 %v1728
      %v1730 = vpop.xlane.xlu0 %1729
      %v1731 = vmul.f32 %v1727, %v1513
      %v1732 = vmul.f32 %v1730, %v1513
      %v1733 = vsub.f32 %v1721, %v1731
      %v1734 = vsub.f32 %v1722, %v1732
      %v1735 = vmul.f32 %v1733, %v1733
      %v1736 = vmul.f32 %v1734, %v1734
      %v1737 = vsel %vm895, %v1735, 0.0
      %1738 = vadd.xlane.f32.xlu0 %v1737
      %v1739 = vpop.xlane.xlu0 %1738
      %v1740 = vsel %vm895, %v1736, 0.0
      %1741 = vadd.xlane.f32.xlu0 %v1740
      %v1742 = vpop.xlane.xlu0 %1741
      %v1743 = vmul.f32 %v1739, %v1513
      %v1744 = vmul.f32 %v1742, %v1513
      %v1745 = vadd.f32 %v1743, 1e-12
      %v1746 = vadd.f32 %v1744, 1e-12
      %v1747 = vrsqrt.pop %v1745
      %v1748 = vrsqrt.pop %v1746
      %v1749 = vmul.f32 %v1733, %v1747
      %v1750 = vmul.f32 %v1734, %v1748
      %v1752 = vlaneseq
      %v1753 = vshrl.u32 %v1752, 7
      %v1754 = vsub.s32 0, %v1753
      %v1755 = vrot.slane %v1723, %v1754
      %v1757 = vmul.f32 %v1749, %v1755
      %v1758 = vmul.f32 %v1750, %v1755
      %v1760 = vlaneseq
      %v1761 = vshrl.u32 %v1760, 7
      %v1762 = vsub.s32 0, %v1761
      %v1763 = vrot.slane %v1724, %v1762
      %v1765 = vadd.f32 %v1757, %v1763
      %v1766 = vadd.f32 %v1758, %v1763
      %1767 = vst.msk [vmem:[#allocation2] sm:$0xff] %vm895, %v1765
      %1768 = vst.msk [vmem:[#allocation2 + $0x8] sm:$0xff] %vm895, %v1766
      %p1769 = scmp.eq.s32.totalorder %s32, 1
      // Predicated region
      $region109: #{bert_joint_forward.1} parent=103 // pred_check
        %p1770 = pneg %p1769
      $region110: #{bert_joint_forward.1} parent=103 // pred_check_branch
        %1772 = sbr.rel (%p1770) target = $region112
      $region111: #{bert_joint_forward.1} parent=103 // pred_region
        %v1773 = vpack.c.bf16 %v1766, %v1765
        %v1774 = vld [vmem:[%s18] sm:$0xf]
        %v1775 = vld [vmem:[%s18 + $0x4] sm:$0xf]
        %v1776 = vld [vmem:[%s18 + $0x8] sm:$0xf]
        %v1777 = vld [vmem:[%s18 + $0xc] sm:$0xf]
        %v1778 = vld [vmem:[%s16] sm:$0xf]
        %v1779 = vld [vmem:[%s16 + $0x4] sm:$0xf]
        %v1780 = vld [vmem:[%s16 + $0x8] sm:$0xf]
        %v1781 = vld [vmem:[%s16 + $0xc] sm:$0xf]
        %v1782 = vld [vmem:[%s17] sm:$0x1]
        %v1784 = vlaneseq
        %v1785 = vshrl.u32 %v1784, 7
        %v1786 = vsub.s32 0, %v1785
        %v1787 = vrot.slane %v1782, %v1786
        %v1793 = vunpack.c.l.b16 %v1778
        %v1794 = vunpack.c.l.b16 %v1779
        %v1795 = vunpack.c.l.b16 %v1780
        %v1796 = vunpack.c.l.b16 %v1781
        %v1797 = vpack.c.b16 %v1794, %v1793
        %v1798 = vpack.c.b16 %v1796, %v1795
        %v1802 = vsel %vm895, %v1773, 0
        %1804 = vmatprep.subr.bf16.mxu0 0
        %1805 = vmatpush1.bf16.msra.mxu0 %v1797
        %1806 = vmatprep.subr.bf16.mxu0 0
        %1807 = vmatpush1.bf16.msra.mxu0 %v1798
        %1808 = vmatprep.subr.bf16.mxu0 0
        %1809 = vmatpush1.bf16.msra.mxu0 0
        %1810 = vmatprep.subr.bf16.mxu0 0
        %1811 = vmatpush1.bf16.msra.mxu0 0
        %1812 = vmatprep.subr.bf16.mxu0 0
        %1813 = vmatpush1.bf16.msra.mxu0 0
        %1814 = vmatprep.subr.bf16.mxu0 0
        %1815 = vmatpush1.bf16.msra.mxu0 0
        %1816 = vmatprep.subr.bf16.mxu0 0
        %1817 = vmatpush1.bf16.msra.mxu0 0
        %1818 = vmatprep.subr.bf16.mxu0 0
        %1819 = vmatpush1.bf16.msra.mxu0 0
        %1820 = vmatprep.subr.bf16.mxu0 0
        %1821 = vmatpush1.bf16.msra.mxu0 0
        %1822 = vmatprep.subr.bf16.mxu0 0
        %1823 = vmatpush1.bf16.msra.mxu0 0
        %1824 = vmatprep.subr.bf16.mxu0 0
        %1825 = vmatpush1.bf16.msra.mxu0 0
        %1826 = vmatprep.subr.bf16.mxu0 0
        %1827 = vmatpush1.bf16.msra.mxu0 0
        %1828 = vmatprep.subr.bf16.mxu0 0
        %1829 = vmatpush1.bf16.msra.mxu0 0
        %1830 = vmatprep.subr.bf16.mxu0 0
        %1831 = vmatpush1.bf16.msra.mxu0 0
        %1832 = vmatprep.subr.bf16.mxu0 0
        %1833 = vmatpush1.bf16.msra.mxu0 0
        %1834 = vmatprep.subr.bf16.mxu0 0
        %1835 = vmatpush1.bf16.msra.mxu0 0
        %1836 = vmatprep.mubr.bf16.mxu0 0
        %1837 = vmatmul.mubr.bf16.gmra.mrb[0].mxu0 %v1802
        %v1838 = vpop.f32.mrb[0].mxu0
        %v1839 = vadd.f32 %v1787, %v1838
        %v1840 = vpop.f32.mrb[0].mxu0
        %v1841 = vpop.f32.mrb[0].mxu0
        %v1842 = vadd.f32 %v1787, %v1841
        %v1843 = vpop.f32.mrb[0].mxu0
        %1844 = vdwg.mxu0
        %v1845 = vtanh.pop %v1839
        %v1846 = vtanh.pop %v1842
        %v1847 = vpack.c.bf16 %v1846, %v1845
        %v1848 = vld [vmem:[%s19] sm:$0xf]
        %v1849 = vld [vmem:[%s19 + $0x4] sm:$0xf]
        %v1850 = vld [vmem:[%s19 + $0x8] sm:$0xf]
        %v1851 = vld [vmem:[%s19 + $0xc] sm:$0xf]
        %v1856 = vunpack.c.l.b16 %v1848
        %v1857 = vunpack.c.l.b16 %v1849
        %v1858 = vunpack.c.l.b16 %v1850
        %v1859 = vunpack.c.l.b16 %v1851
        %v1860 = vpack.c.b16 %v1857, %v1856
        %v1861 = vpack.c.b16 %v1859, %v1858
        %v1865 = vsel %vm895, %v1847, 0
        %1867 = vmatprep.subr.bf16.mxu0 0
        %1868 = vmatpush1.bf16.msra.mxu0 %v1860
        %1869 = vmatprep.subr.bf16.mxu0 0
        %1870 = vmatpush1.bf16.msra.mxu0 %v1861
        %1871 = vmatprep.subr.bf16.mxu0 0
        %1872 = vmatpush1.bf16.msra.mxu0 0
        %1873 = vmatprep.subr.bf16.mxu0 0
        %1874 = vmatpush1.bf16.msra.mxu0 0
        %1875 = vmatprep.subr.bf16.mxu0 0
        %1876 = vmatpush1.bf16.msra.mxu0 0
        %1877 = vmatprep.subr.bf16.mxu0 0
        %1878 = vmatpush1.bf16.msra.mxu0 0
        %1879 = vmatprep.subr.bf16.mxu0 0
        %1880 = vmatpush1.bf16.msra.mxu0 0
        %1881 = vmatprep.subr.bf16.mxu0 0
        %1882 = vmatpush1.bf16.msra.mxu0 0
        %1883 = vmatprep.subr.bf16.mxu0 0
        %1884 = vmatpush1.bf16.msra.mxu0 0
        %1885 = vmatprep.subr.bf16.mxu0 0
        %1886 = vmatpush1.bf16.msra.mxu0 0
        %1887 = vmatprep.subr.bf16.mxu0 0
        %1888 = vmatpush1.bf16.msra.mxu0 0
        %1889 = vmatprep.subr.bf16.mxu0 0
        %1890 = vmatpush1.bf16.msra.mxu0 0
        %1891 = vmatprep.subr.bf16.mxu0 0
        %1892 = vmatpush1.bf16.msra.mxu0 0
        %1893 = vmatprep.subr.bf16.mxu0 0
        %1894 = vmatpush1.bf16.msra.mxu0 0
        %1895 = vmatprep.subr.bf16.mxu0 0
        %1896 = vmatpush1.bf16.msra.mxu0 0
        %1897 = vmatprep.subr.bf16.mxu0 0
        %1898 = vmatpush1.bf16.msra.mxu0 0
        %1899 = vmatprep.mubr.bf16.mxu0 0
        %1900 = vmatmul.mubr.bf16.gmra.mrb[0].mxu0 %v1865
        %v1901 = vpop.f32.mrb[0].mxu0
        %v1902 = vadd.f32 0.0, %v1901
        %v1903 = vpop.f32.mrb[0].mxu0
        %v1904 = vpop.f32.mrb[0].mxu0
        %v1905 = vadd.f32 0.0, %v1904
        %v1906 = vpop.f32.mrb[0].mxu0
        %1907 = vdwg.mxu0
        %v1912 = vunpack.c.l.b16 %v1774
        %v1913 = vunpack.c.l.b16 %v1775
        %v1914 = vunpack.c.l.b16 %v1776
        %v1915 = vunpack.c.l.b16 %v1777
        %v1916 = vpack.c.b16 %v1913, %v1912
        %v1917 = vpack.c.b16 %v1915, %v1914
        %1920 = vmatprep.subr.bf16.mxu0 0
        %1921 = vmatpush1.bf16.msra.mxu0 %v1916
        %1922 = vmatprep.subr.bf16.mxu0 0
        %1923 = vmatpush1.bf16.msra.mxu0 %v1917
        %1924 = vmatprep.subr.bf16.mxu0 0
        %1925 = vmatpush1.bf16.msra.mxu0 0
        %1926 = vmatprep.subr.bf16.mxu0 0
        %1927 = vmatpush1.bf16.msra.mxu0 0
        %1928 = vmatprep.subr.bf16.mxu0 0
        %1929 = vmatpush1.bf16.msra.mxu0 0
        %1930 = vmatprep.subr.bf16.mxu0 0
        %1931 = vmatpush1.bf16.msra.mxu0 0
        %1932 = vmatprep.subr.bf16.mxu0 0
        %1933 = vmatpush1.bf16.msra.mxu0 0
        %1934 = vmatprep.subr.bf16.mxu0 0
        %1935 = vmatpush1.bf16.msra.mxu0 0
        %1936 = vmatprep.subr.bf16.mxu0 0
        %1937 = vmatpush1.bf16.msra.mxu0 0
        %1938 = vmatprep.subr.bf16.mxu0 0
        %1939 = vmatpush1.bf16.msra.mxu0 0
        %1940 = vmatprep.subr.bf16.mxu0 0
        %1941 = vmatpush1.bf16.msra.mxu0 0
        %1942 = vmatprep.subr.bf16.mxu0 0
        %1943 = vmatpush1.bf16.msra.mxu0 0
        %1944 = vmatprep.subr.bf16.mxu0 0
        %1945 = vmatpush1.bf16.msra.mxu0 0
        %1946 = vmatprep.subr.bf16.mxu0 0
        %1947 = vmatpush1.bf16.msra.mxu0 0
        %1948 = vmatprep.subr.bf16.mxu0 0
        %1949 = vmatpush1.bf16.msra.mxu0 0
        %1950 = vmatprep.subr.bf16.mxu0 0
        %1951 = vmatpush1.bf16.msra.mxu0 0
        %1952 = vmatprep.mubr.bf16.mxu0 0
        %1953 = vmatmul.mubr.bf16.gmra.mrb[0].mxu0 %v1802
        %v1954 = vpop.f32.mrb[0].mxu0
        %v1955 = vadd.f32 %v1902, %v1954
        %v1956 = vpop.f32.mrb[0].mxu0
        %v1957 = vpop.f32.mrb[0].mxu0
        %v1958 = vadd.f32 %v1905, %v1957
        %v1959 = vpop.f32.mrb[0].mxu0
        %1960 = vdwg.mxu0
        %v1961 = vld [vmem:[%s20] sm:$0x1]
        %v1963 = vlaneseq
        %v1964 = vshrl.u32 %v1963, 7
        %v1965 = vsub.s32 0, %v1964
        %v1966 = vrot.slane %v1961, %v1965
        %v1968 = vadd.f32 %v1955, %v1966
        %v1969 = vadd.f32 %v1958, %v1966
        %1970 = vst [vmem:[%s21] sm:$0xff] %v1968
        %1971 = vst [vmem:[%s21 + $0x8] sm:$0xff] %v1969
      $region112: #{bert_joint_forward.1} parent=103 // pred_fallthru
        _
      // Predicated region
      $region113: #{bert_joint_forward.1} parent=103 // pred_check
        %p1972 = pneg %p546
      $region114: #{bert_joint_forward.1} parent=103 // pred_check_branch
        %1974 = sbr.rel (%p1972) target = $region116
      $region115: #{bert_joint_forward.1} parent=103 // pred_region
        _
      $region116: #{bert_joint_forward.1} parent=103 // pred_fallthru
        _
      // Predicated region
      $region117: #{bert_joint_forward.1} parent=103 // pred_check
        %p1975 = pneg %p546
      $region118: #{bert_joint_forward.1} parent=103 // pred_check_branch
        %1977 = sbr.rel (%p1975) target = $region120
      $region119: #{bert_joint_forward.1} parent=103 // pred_region
        _
      $region120: #{bert_joint_forward.1} parent=103 // pred_fallthru
        _
    $region104: #{bert_joint_forward.1} parent=5 // pred_fallthru
      _
    %p1978 = scmp.le.s32.totalorder 2, %s27
    // Predicated region
    $region121: #{bert_joint_forward.1} parent=5 // pred_check
      %p1979 = pneg %p1978
    $region122: #{bert_joint_forward.1} parent=5 // pred_check_branch
      %1981 = sbr.rel (%p1979) target = $region124
    $region123: #{bert_joint_forward.1} parent=5 // pred_region
      %s1982 = ssub.s32 %s27, 2
    $region124: #{bert_joint_forward.1} parent=5 // pred_fallthru
      _
  $region6: #{bert_joint_forward.1} parent=0 // loop_footer
    %s31 = sadd.s32 1, %s27
  $region7: #{bert_joint_forward.1} parent=0 // loop_footer_branch
    %26 = sbr.rel target = $region3
  $region8: #{bert_joint_forward.1} parent=0 // loop_exit
    _

</llo_original>
